<compile_context>
chip_gen: v6e
topology: v6e:2x2x1
jax: 0.10.0
libtpu: 0.0.40
codegen_flags: <defaults>
</compile_context>

<pallas_src>
import functools

import numpy as np

import jax
import jax.numpy as jnp
from jax.experimental import pallas as pl
from jax.experimental.pallas import tpu as pltpu

KSIZE = 3
C_IN = 3
C_FEAT = 32
K = KSIZE * KSIZE * C_IN          # 27 contraction rows (tap-major, channel-minor)
K_PAD = 32                        # padded contraction dim (zero weight columns)
IN_EPS = 1e-5                     # nn.InstanceNorm2d default eps
VGG_MEAN_BGR = (103.939, 116.779, 123.680)


class Opt:
    vgg_mean = True
    no_vgg_instance = False


# ----------------------------------------------------------------------------
# Pallas kernel: per sample, fused preprocess -> im2col -> conv -> ReLU -> IN
#                -> per-pair squared-diff lane sums
# ----------------------------------------------------------------------------
def _contrast_kernel(*refs, n_img, hw, shifts, use_instance_norm):
    n_other = n_img - 1
    img_refs = refs[:n_img]                                   # (1, C_IN, HW) f32 each
    w_ref, b_ref, pb_ref, mask_ref = refs[n_img:n_img + 4]
    out_refs = refs[n_img + 4:n_img + 4 + n_other]            # (1, 1, HW) f32 each
    pre_ref, rhs_ref = refs[n_img + 4 + n_other:]             # VMEM scratch

    nhw = n_img * hw

    # 1) vgg_preprocess in VMEM (channel swap is folded into the weight columns):
    #    pre = 127.5 * x + (127.5 - mean);  images lane-concatenated [a | p | n].
    pb = pb_ref[...]                                          # (C_IN, 1) f32
    for m in range(n_img):
        pre_ref[:, m * hw:(m + 1) * hw] = img_refs[m][0] * 127.5 + pb

    pre = pre_ref[...]                                        # (C_IN, n_img*HW) f32

    # 2) in-kernel im2col: per tap, lane roll + zero-padding mask.  Cross-image
    #    wrap positions are always masked (their padded read is out of bounds),
    #    so rolling the lane-concatenated tile is exact.
    for t, s in enumerate(shifts):
        shifted = pre if s == 0 else pltpu.roll(pre, shift=(-s) % nhw, axis=1)
        tap = shifted * mask_ref[t:t + 1, :]                  # (C_IN, nhw) f32
        rhs_ref[C_IN * t:C_IN * (t + 1), :] = tap
    # keep the K->K_PAD pad rows finite (their weight columns are zero)
    rhs_ref[K:K_PAD, :] = jnp.zeros((K_PAD - K, nhw), jnp.float32)

    # 3) one fused conv-as-matmul over all images, bias, ReLU (f32 accumulate)
    feats = jnp.dot(w_ref[...], rhs_ref[...].astype(jnp.bfloat16),
                    preferred_element_type=jnp.float32) + b_ref[...]
    feats = jnp.maximum(feats, 0.0)                           # (C_FEAT, n_img*HW)

    # 4) per-image instance norm (single-pass moments) over the spatial lanes
    def inorm(f):
        if not use_instance_norm:
            return f
        mu = jnp.mean(f, axis=-1, keepdims=True)
        ex2 = jnp.mean(f * f, axis=-1, keepdims=True)
        var = ex2 - mu * mu                                   # biased var (InstanceNorm2d)
        return (f - mu) * jax.lax.rsqrt(var + IN_EPS)

    fa = inorm(feats[:, 0:hw])                                # anchor, computed once
    for m in range(1, n_img):
        fm = inorm(feats[:, m * hw:(m + 1) * hw])
        d = fa - fm
        out_refs[m - 1][0] = jnp.sum(d * d, axis=0, keepdims=True)   # (1, HW) lane-dense


# ----------------------------------------------------------------------------
# Wrapper: one pallas_call per set of (anchor, other...) image stacks
# ----------------------------------------------------------------------------
def contrast_partial_sums(vgg_params, imgs, opt):
    """imgs = (a, p[, n]) each (B, C_IN, H, W) f32.  Returns a tuple of
    per-sample lane-dense partial sums (B, 1, H*W), one per non-anchor image,
    of sum_c (IN(vgg(pre(a))) - IN(vgg(pre(x))))^2."""
    w, bias = vgg_params
    n_img = len(imgs)
    B, C, H, W = imgs[0].shape
    assert C == C_IN
    HW = H * W                      # lane axis; multiples of 128 are lane-dense
    NHW = n_img * HW

    # conv weight: fold the RGB->BGR swap of vgg_preprocess into the per-tap
    # channel column order, pad K 27->32 with zeros, cast to bf16 for the MXU.
    w_k = jnp.asarray(w, jnp.float32).reshape(C_FEAT, KSIZE * KSIZE, C_IN)[:, :, ::-1]
    w_k = w_k.reshape(C_FEAT, K)
    w_k = jnp.pad(w_k, ((0, 0), (0, K_PAD - K))).astype(jnp.bfloat16)
    bias_k = jnp.asarray(bias, jnp.float32).reshape(C_FEAT, 1)

    # vgg_preprocess affine (on un-swapped RGB channels): pre = 127.5*x + prebias
    mean_rgb = np.array(VGG_MEAN_BGR[::-1], np.float32) if opt.vgg_mean \
        else np.zeros(C_IN, np.float32)
    prebias = jnp.asarray((127.5 - mean_rgb).reshape(C_IN, 1), jnp.float32)

    # per-tap flat lane shift + zero-padding validity mask (tiled over images)
    shifts, mask_rows = [], []
    ii, jj = np.meshgrid(np.arange(H), np.arange(W), indexing="ij")
    for di in range(KSIZE):
        for dj in range(KSIZE):
            shifts.append((di - 1) * W + (dj - 1))
            valid = ((ii + di - 1 >= 0) & (ii + di - 1 < H) &
                     (jj + dj - 1 >= 0) & (jj + dj - 1 < W))
            mask_rows.append(np.tile(valid.reshape(HW).astype(np.float32), n_img))
    masks = jnp.asarray(np.stack(mask_rows, axis=0))          # (9, NHW) f32

    imgs_flat = tuple(jnp.asarray(x, jnp.float32).reshape(B, C_IN, HW) for x in imgs)

    kernel = functools.partial(
        _contrast_kernel, n_img=n_img, hw=HW, shifts=tuple(shifts),
        use_instance_norm=not opt.no_vgg_instance)

    img_specs = [pl.BlockSpec((1, C_IN, HW), lambda b: (b, 0, 0))
                 for _ in range(n_img)]
    const_specs = [
        pl.BlockSpec((C_FEAT, K_PAD), lambda b: (0, 0)),
        pl.BlockSpec((C_FEAT, 1), lambda b: (0, 0)),
        pl.BlockSpec((C_IN, 1), lambda b: (0, 0)),
        pl.BlockSpec((KSIZE * KSIZE, NHW), lambda b: (0, 0)),
    ]
    out_shapes = tuple(jax.ShapeDtypeStruct((B, 1, HW), jnp.float32)
                       for _ in range(n_img - 1))
    out_specs = [pl.BlockSpec((1, 1, HW), lambda b: (b, 0, 0))
                 for _ in range(n_img - 1)]

    partials = pl.pallas_call(
        kernel,
        out_shape=out_shapes,
        grid_spec=pltpu.PrefetchScalarGridSpec(
            num_scalar_prefetch=0,
            grid=(B,),
            in_specs=img_specs + const_specs,
            out_specs=out_specs,
            scratch_shapes=[
                pltpu.VMEM((C_IN, NHW), jnp.float32),   # preprocessed [a|p|n]
                pltpu.VMEM((K_PAD, NHW), jnp.float32),  # fused im2col RHS
            ],
        ),
        compiler_params=pltpu.CompilerParams(
            dimension_semantics=("parallel",),
            # tiny working set here; raise toward 64-96 MiB on v5e/v6e if large
            # full-HW blocks are used (keep the tiled variant for v7x instead).
            vmem_limit_bytes=32 * 1024 * 1024,
        ),
    )(*imgs_flat, w_k, bias_k, prebias, masks)

    if not isinstance(partials, (list, tuple)):
        partials = (partials,)
    return tuple(partials)


def _vgg_distances(vgg_params, a, p, n, opt, ablation):
    """d_ap (and d_an unless ablation) = the two compute_vgg_loss values."""
    imgs = (a, p) if ablation else (a, p, n)
    partials = contrast_partial_sums(vgg_params, imgs, opt)
    B, _, H, W = a.shape
    denom = jnp.float32(B * C_FEAT * H * W)      # torch.mean over (B, C, H, W)
    d_ap = jnp.sum(partials[0]) / denom
    d_an = None if ablation else jnp.sum(partials[1]) / denom
    return d_ap, d_an


# ----------------------------------------------------------------------------
# ContrastLoss.forward
# ----------------------------------------------------------------------------
def contrast_loss(vgg_params, a, p, n, opt, mode, group_n, ablation=False):
    weights = [1.0, 1.0, 1.0, 1.0]
    if group_n != 0:
        return None  # mirrors the PyTorch module (no return when group_n != 0)
    loss = jnp.float32(0.0)
    if mode == 'single':
        # d_ap / d_an do not depend on i: one fused kernel launch, scaled by the
        # weight sum.  weights[i] is still indexed so len(a) > 4 raises
        # IndexError exactly like the PyTorch module.
        w_sum = sum(weights[i] for i in range(len(a)))
        d_ap, d_an = _vgg_distances(vgg_params, a, p, n, opt, ablation)
        contrastive = d_ap if ablation else d_ap / (d_an + 1e-07)
        loss = loss + w_sum * contrastive
    elif mode == 'multiple':
        # all len(a) triples stacked along batch -> ONE pallas_call
        G = len(a)
        wv = jnp.asarray([weights[i] for i in range(G)], jnp.float32)  # IndexError if G>4
        a_all = jnp.concatenate(list(a), axis=0)
        p_all = jnp.concatenate(list(p), axis=0)
        imgs = (a_all, p_all) if ablation else \
               (a_all, p_all, jnp.concatenate(list(n), axis=0))
        partials = contrast_partial_sums(vgg_params, imgs, opt)
        Bg, _, H, W = a[0].shape
        denom = jnp.float32(Bg * C_FEAT * H * W)
        d_ap = jnp.sum(partials[0].reshape(G, -1), axis=1) / denom     # (G,)
        if ablation:
            contrastive = d_ap
        else:
            d_an = jnp.sum(partials[1].reshape(G, -1), axis=1) / denom
            contrastive = d_ap / (d_an + 1e-07)
        loss = loss + jnp.sum(wv * contrastive)
    return loss


# ----------------------------------------------------------------------------
# Pure-JAX reference (f32 end-to-end, sanity check only)
# ----------------------------------------------------------------------------
def vgg_preprocess(x_nchw, opt):
    """RGB [-1,1] NCHW -> BGR [0,255] minus VGG mean (mirrors vgg_preprocess)."""
    r, g, b = x_nchw[:, 0:1], x_nchw[:, 1:2], x_nchw[:, 2:3]
    x = jnp.concatenate([b, g, r], axis=1)
    x = (x + 1.0) * 255.0 * 0.5
    if opt.vgg_mean:
        mean = jnp.array(VGG_MEAN_BGR, dtype=x.dtype)
        x = x - mean.reshape(1, 3, 1, 1)
    return x


def im2col_t(x_nchw):
    """Reference-only NCHW -> (B, 27, H*W) patch columns (3x3, stride 1, pad 1)."""
    B, C, H, W = x_nchw.shape
    pad = KSIZE // 2
    xp = jnp.pad(x_nchw, ((0, 0), (0, 0), (pad, pad), (pad, pad)))
    taps = []
    for di in range(KSIZE):
        for dj in range(KSIZE):
            taps.append(xp[:, :, di:di + H, dj:dj + W])
    patches = jnp.concatenate(taps, axis=1)
    return patches.reshape(B, KSIZE * KSIZE * C, H * W)


def _ref_compute_vgg_loss(vgg_params, img, target, opt):
    w, bias = vgg_params

    def feats(x):
        ptc = im2col_t(vgg_preprocess(x, opt))                         # (B, 27, HW)
        f = jnp.maximum(jnp.einsum('ck,bkp->bcp', w, ptc) + bias[None], 0.0)
        if not opt.no_vgg_instance:
            mu = jnp.mean(f, axis=-1, keepdims=True)
            var = jnp.mean((f - mu) ** 2, axis=-1, keepdims=True)
            f = (f - mu) / jnp.sqrt(var + IN_EPS)
        return f

    return jnp.mean((feats(img) - feats(target)) ** 2)


def _ref_contrast_loss(vgg_params, a, p, n, opt, ablation=False):
    weights = [1.0, 1.0, 1.0, 1.0]
    loss = 0.0
    for i in range(len(a)):
        d_ap = _ref_compute_vgg_loss(vgg_params, a, p, opt)
        if not ablation:
            d_an = _ref_compute_vgg_loss(vgg_params, a, n, opt)
            contrastive = d_ap / (d_an + 1e-07)
        else:
            contrastive = d_ap
        loss = loss + weights[i] * contrastive
    return loss


if __name__ == "__main__":
    key = jax.random.PRNGKey(0)
    k1, k2, k3, k4, k5 = jax.random.split(key, 5)

    B, H, W = 2, 16, 16
    a = jax.random.uniform(k1, (B, C_IN, H, W), jnp.float32, -1.0, 1.0)
    p = jax.random.uniform(k2, (B, C_IN, H, W), jnp.float32, -1.0, 1.0)
    n = jax.random.uniform(k3, (B, C_IN, H, W), jnp.float32, -1.0, 1.0)

    # Deterministic synthetic "VGG": one 3x3 conv (3 -> C_FEAT channels) + ReLU,
    # weights laid out tap-major / BGR-channel-minor (the im2col convention).
    w_conv = jax.random.normal(k4, (C_FEAT, K), jnp.float32) * 0.05
    b_conv = jax.random.normal(k5, (C_FEAT, 1), jnp.float32) * 0.01

    opt = Opt()
    loss = contrast_loss((w_conv, b_conv), a, p, n, opt,
                         mode='single', group_n=0, ablation=False)
    loss = jax.block_until_ready(loss)

    ref = _ref_contrast_loss((w_conv, b_conv), a, p, n, opt, ablation=False)
    ref = jax.block_until_ready(ref)

    assert jnp.isfinite(loss), "loss is not finite"
    assert jnp.allclose(loss, ref, rtol=5e-2, atol=1e-4), (loss, ref)
    print("KERNEL_OK")
</pallas_src>

<mosaic_0001>
module attributes {stable_mosaic.version = 11 : i64} {
  func.func @_contrast_kernel(%arg0: i32, %arg1: memref<1x3x256xf32, #tpu.memory_space<vmem>>, %arg2: memref<1x3x256xf32, #tpu.memory_space<vmem>>, %arg3: memref<1x3x256xf32, #tpu.memory_space<vmem>>, %arg4: memref<32x32xbf16, #tpu.memory_space<vmem>>, %arg5: memref<32x1xf32, #tpu.memory_space<vmem>>, %arg6: memref<3x1xf32, #tpu.memory_space<vmem>>, %arg7: memref<9x768xf32, #tpu.memory_space<vmem>>, %arg8: memref<1x1x256xf32, #tpu.memory_space<vmem>>, %arg9: memref<1x1x256xf32, #tpu.memory_space<vmem>>, %arg10: memref<3x768xf32, #tpu.memory_space<vmem>>, %arg11: memref<32x768xf32, #tpu.memory_space<vmem>>) attributes {dimension_semantics = [#tpu.dimension_semantics<parallel>], iteration_bounds = array<i64: 2>, scalar_prefetch = 0 : i64, scratch_operands = 2 : i64, tpu.core_type = #tpu.core_type<tc>, window_params = [{transform_indices = @transform_0, window_bounds = array<i64: 1, 3, 256>}, {transform_indices = @transform_1, window_bounds = array<i64: 1, 3, 256>}, {transform_indices = @transform_2, window_bounds = array<i64: 1, 3, 256>}, {pipeline_mode = #tpu.pipeline_mode<synchronous>, transform_indices = @transform_3, window_bounds = array<i64: 32, 32>}, {pipeline_mode = #tpu.pipeline_mode<synchronous>, transform_indices = @transform_4, window_bounds = array<i64: 32, 1>}, {pipeline_mode = #tpu.pipeline_mode<synchronous>, transform_indices = @transform_5, window_bounds = array<i64: 3, 1>}, {pipeline_mode = #tpu.pipeline_mode<synchronous>, transform_indices = @transform_6, window_bounds = array<i64: 9, 768>}, {transform_indices = @transform_7, window_bounds = array<i64: 1, 1, 256>}, {transform_indices = @transform_8, window_bounds = array<i64: 1, 1, 256>}]} {
    %c0 = arith.constant 0 : index
    %c0_0 = arith.constant 0 : index
    %0 = vector.load %arg6[%c0, %c0_0] : memref<3x1xf32, #tpu.memory_space<vmem>>, vector<3x1xf32>
    %c0_1 = arith.constant 0 : index
    %c0_2 = arith.constant 0 : index
    %c0_3 = arith.constant 0 : index
    %1 = vector.load %arg1[%c0_1, %c0_2, %c0_3] : memref<1x3x256xf32, #tpu.memory_space<vmem>>, vector<1x3x256xf32>
    %2 = vector.shape_cast %1 : vector<1x3x256xf32> to vector<3x256xf32>
    %cst = arith.constant 1.275000e+02 : f32
    %3 = vector.broadcast %cst : f32 to vector<3x256xf32>
    %4 = arith.mulf %2, %3 : vector<3x256xf32>
    %5 = vector.broadcast %0 : vector<3x1xf32> to vector<3x256xf32>
    %6 = arith.addf %4, %5 : vector<3x256xf32>
    %c0_4 = arith.constant 0 : index
    %c0_5 = arith.constant 0 : index
    %7 = vector.load %arg10[%c0_4, %c0_5] : memref<3x768xf32, #tpu.memory_space<vmem>>, vector<3x256xf32>
    tpu.vector_store %arg10[%c0_4, %c0_5], %6 {strides = array<i32>} : memref<3x768xf32, #tpu.memory_space<vmem>>, vector<3x256xf32>,
    %c0_6 = arith.constant 0 : index
    %c0_7 = arith.constant 0 : index
    %c0_8 = arith.constant 0 : index
    %8 = vector.load %arg2[%c0_6, %c0_7, %c0_8] : memref<1x3x256xf32, #tpu.memory_space<vmem>>, vector<1x3x256xf32>
    %9 = vector.shape_cast %8 : vector<1x3x256xf32> to vector<3x256xf32>
    %cst_9 = arith.constant 1.275000e+02 : f32
    %10 = vector.broadcast %cst_9 : f32 to vector<3x256xf32>
    %11 = arith.mulf %9, %10 : vector<3x256xf32>
    %12 = vector.broadcast %0 : vector<3x1xf32> to vector<3x256xf32>
    %13 = arith.addf %11, %12 : vector<3x256xf32>
    %c0_10 = arith.constant 0 : index
    %c256 = arith.constant 256 : index
    %14 = vector.load %arg10[%c0_10, %c256] : memref<3x768xf32, #tpu.memory_space<vmem>>, vector<3x256xf32>
    tpu.vector_store %arg10[%c0_10, %c256], %13 {strides = array<i32>} : memref<3x768xf32, #tpu.memory_space<vmem>>, vector<3x256xf32>,
    %c0_11 = arith.constant 0 : index
    %c0_12 = arith.constant 0 : index
    %c0_13 = arith.constant 0 : index
    %15 = vector.load %arg3[%c0_11, %c0_12, %c0_13] : memref<1x3x256xf32, #tpu.memory_space<vmem>>, vector<1x3x256xf32>
    %16 = vector.shape_cast %15 : vector<1x3x256xf32> to vector<3x256xf32>
    %cst_14 = arith.constant 1.275000e+02 : f32
    %17 = vector.broadcast %cst_14 : f32 to vector<3x256xf32>
    %18 = arith.mulf %16, %17 : vector<3x256xf32>
    %19 = vector.broadcast %0 : vector<3x1xf32> to vector<3x256xf32>
    %20 = arith.addf %18, %19 : vector<3x256xf32>
    %c0_15 = arith.constant 0 : index
    %c512 = arith.constant 512 : index
    %21 = vector.load %arg10[%c0_15, %c512] : memref<3x768xf32, #tpu.memory_space<vmem>>, vector<3x256xf32>
    tpu.vector_store %arg10[%c0_15, %c512], %20 {strides = array<i32>} : memref<3x768xf32, #tpu.memory_space<vmem>>, vector<3x256xf32>,
    %c0_16 = arith.constant 0 : index
    %c0_17 = arith.constant 0 : index
    %22 = vector.load %arg10[%c0_16, %c0_17] : memref<3x768xf32, #tpu.memory_space<vmem>>, vector<3x768xf32>
    %c17_i32 = arith.constant 17 : i32
    %23 = tpu.dynamic_rotate %22 by %c17_i32 dim 1 : vector<3x768xf32>, i32 -> vector<3x768xf32>
    %c0_18 = arith.constant 0 : index
    %c0_19 = arith.constant 0 : index
    %24 = vector.load %arg7[%c0_18, %c0_19] : memref<9x768xf32, #tpu.memory_space<vmem>>, vector<1x768xf32>
    %25 = vector.broadcast %24 : vector<1x768xf32> to vector<3x768xf32>
    %26 = arith.mulf %23, %25 : vector<3x768xf32>
    %c0_20 = arith.constant 0 : index
    %c0_21 = arith.constant 0 : index
    %27 = vector.load %arg11[%c0_20, %c0_21] : memref<32x768xf32, #tpu.memory_space<vmem>>, vector<3x768xf32>
    tpu.vector_store %arg11[%c0_20, %c0_21], %26 {strides = array<i32>} : memref<32x768xf32, #tpu.memory_space<vmem>>, vector<3x768xf32>,
    %c16_i32 = arith.constant 16 : i32
    %28 = tpu.dynamic_rotate %22 by %c16_i32 dim 1 : vector<3x768xf32>, i32 -> vector<3x768xf32>
    %c1 = arith.constant 1 : index
    %c0_22 = arith.constant 0 : index
    %29 = vector.load %arg7[%c1, %c0_22] : memref<9x768xf32, #tpu.memory_space<vmem>>, vector<1x768xf32>
    %30 = vector.broadcast %29 : vector<1x768xf32> to vector<3x768xf32>
    %31 = arith.mulf %28, %30 : vector<3x768xf32>
    %c3 = arith.constant 3 : index
    %c0_23 = arith.constant 0 : index
    %32 = vector.load %arg11[%c3, %c0_23] : memref<32x768xf32, #tpu.memory_space<vmem>>, vector<3x768xf32>
    tpu.vector_store %arg11[%c3, %c0_23], %31 {strides = array<i32>} : memref<32x768xf32, #tpu.memory_space<vmem>>, vector<3x768xf32>,
    %c15_i32 = arith.constant 15 : i32
    %33 = tpu.dynamic_rotate %22 by %c15_i32 dim 1 : vector<3x768xf32>, i32 -> vector<3x768xf32>
    %c2 = arith.constant 2 : index
    %c0_24 = arith.constant 0 : index
    %34 = vector.load %arg7[%c2, %c0_24] : memref<9x768xf32, #tpu.memory_space<vmem>>, vector<1x768xf32>
    %35 = vector.broadcast %34 : vector<1x768xf32> to vector<3x768xf32>
    %36 = arith.mulf %33, %35 : vector<3x768xf32>
    %c6 = arith.constant 6 : index
    %c0_25 = arith.constant 0 : index
    %37 = vector.load %arg11[%c6, %c0_25] : memref<32x768xf32, #tpu.memory_space<vmem>>, vector<3x768xf32>
    tpu.vector_store %arg11[%c6, %c0_25], %36 {strides = array<i32>} : memref<32x768xf32, #tpu.memory_space<vmem>>, vector<3x768xf32>,
    %c1_i32 = arith.constant 1 : i32
    %38 = tpu.dynamic_rotate %22 by %c1_i32 dim 1 : vector<3x768xf32>, i32 -> vector<3x768xf32>
    %c3_26 = arith.constant 3 : index
    %c0_27 = arith.constant 0 : index
    %39 = vector.load %arg7[%c3_26, %c0_27] : memref<9x768xf32, #tpu.memory_space<vmem>>, vector<1x768xf32>
    %40 = vector.broadcast %39 : vector<1x768xf32> to vector<3x768xf32>
    %41 = arith.mulf %38, %40 : vector<3x768xf32>
    %c9 = arith.constant 9 : index
    %c0_28 = arith.constant 0 : index
    %42 = vector.load %arg11[%c9, %c0_28] : memref<32x768xf32, #tpu.memory_space<vmem>>, vector<3x768xf32>
    tpu.vector_store %arg11[%c9, %c0_28], %41 {strides = array<i32>} : memref<32x768xf32, #tpu.memory_space<vmem>>, vector<3x768xf32>,
    %c4 = arith.constant 4 : index
    %c0_29 = arith.constant 0 : index
    %43 = vector.load %arg7[%c4, %c0_29] : memref<9x768xf32, #tpu.memory_space<vmem>>, vector<1x768xf32>
    %44 = vector.broadcast %43 : vector<1x768xf32> to vector<3x768xf32>
    %45 = arith.mulf %22, %44 : vector<3x768xf32>
    %c12 = arith.constant 12 : index
    %c0_30 = arith.constant 0 : index
    %46 = vector.load %arg11[%c12, %c0_30] : memref<32x768xf32, #tpu.memory_space<vmem>>, vector<3x768xf32>
    tpu.vector_store %arg11[%c12, %c0_30], %45 {strides = array<i32>} : memref<32x768xf32, #tpu.memory_space<vmem>>, vector<3x768xf32>,
    %c767_i32 = arith.constant 767 : i32
    %47 = tpu.dynamic_rotate %22 by %c767_i32 dim 1 : vector<3x768xf32>, i32 -> vector<3x768xf32>
    %c5 = arith.constant 5 : index
    %c0_31 = arith.constant 0 : index
    %48 = vector.load %arg7[%c5, %c0_31] : memref<9x768xf32, #tpu.memory_space<vmem>>, vector<1x768xf32>
    %49 = vector.broadcast %48 : vector<1x768xf32> to vector<3x768xf32>
    %50 = arith.mulf %47, %49 : vector<3x768xf32>
    %c15 = arith.constant 15 : index
    %c0_32 = arith.constant 0 : index
    %51 = vector.load %arg11[%c15, %c0_32] : memref<32x768xf32, #tpu.memory_space<vmem>>, vector<3x768xf32>
    tpu.vector_store %arg11[%c15, %c0_32], %50 {strides = array<i32>} : memref<32x768xf32, #tpu.memory_space<vmem>>, vector<3x768xf32>,
    %c753_i32 = arith.constant 753 : i32
    %52 = tpu.dynamic_rotate %22 by %c753_i32 dim 1 : vector<3x768xf32>, i32 -> vector<3x768xf32>
    %c6_33 = arith.constant 6 : index
    %c0_34 = arith.constant 0 : index
    %53 = vector.load %arg7[%c6_33, %c0_34] : memref<9x768xf32, #tpu.memory_space<vmem>>, vector<1x768xf32>
    %54 = vector.broadcast %53 : vector<1x768xf32> to vector<3x768xf32>
    %55 = arith.mulf %52, %54 : vector<3x768xf32>
    %c18 = arith.constant 18 : index
    %c0_35 = arith.constant 0 : index
    %56 = vector.load %arg11[%c18, %c0_35] : memref<32x768xf32, #tpu.memory_space<vmem>>, vector<3x768xf32>
    tpu.vector_store %arg11[%c18, %c0_35], %55 {strides = array<i32>} : memref<32x768xf32, #tpu.memory_space<vmem>>, vector<3x768xf32>,
    %c752_i32 = arith.constant 752 : i32
    %57 = tpu.dynamic_rotate %22 by %c752_i32 dim 1 : vector<3x768xf32>, i32 -> vector<3x768xf32>
    %c7 = arith.constant 7 : index
    %c0_36 = arith.constant 0 : index
    %58 = vector.load %arg7[%c7, %c0_36] : memref<9x768xf32, #tpu.memory_space<vmem>>, vector<1x768xf32>
    %59 = vector.broadcast %58 : vector<1x768xf32> to vector<3x768xf32>
    %60 = arith.mulf %57, %59 : vector<3x768xf32>
    %c21 = arith.constant 21 : index
    %c0_37 = arith.constant 0 : index
    %61 = vector.load %arg11[%c21, %c0_37] : memref<32x768xf32, #tpu.memory_space<vmem>>, vector<3x768xf32>
    tpu.vector_store %arg11[%c21, %c0_37], %60 {strides = array<i32>} : memref<32x768xf32, #tpu.memory_space<vmem>>, vector<3x768xf32>,
    %c751_i32 = arith.constant 751 : i32
    %62 = tpu.dynamic_rotate %22 by %c751_i32 dim 1 : vector<3x768xf32>, i32 -> vector<3x768xf32>
    %c8 = arith.constant 8 : index
    %c0_38 = arith.constant 0 : index
    %63 = vector.load %arg7[%c8, %c0_38] : memref<9x768xf32, #tpu.memory_space<vmem>>, vector<1x768xf32>
    %64 = vector.broadcast %63 : vector<1x768xf32> to vector<3x768xf32>
    %65 = arith.mulf %62, %64 : vector<3x768xf32>
    %c24 = arith.constant 24 : index
    %c0_39 = arith.constant 0 : index
    %66 = vector.load %arg11[%c24, %c0_39] : memref<32x768xf32, #tpu.memory_space<vmem>>, vector<3x768xf32>
    tpu.vector_store %arg11[%c24, %c0_39], %65 {strides = array<i32>} : memref<32x768xf32, #tpu.memory_space<vmem>>, vector<3x768xf32>,
    %cst_40 = arith.constant 0.000000e+00 : f32
    %67 = vector.broadcast %cst_40 : f32 to vector<5x768xf32>
    %c27 = arith.constant 27 : index
    %c0_41 = arith.constant 0 : index
    %68 = vector.load %arg11[%c27, %c0_41] : memref<32x768xf32, #tpu.memory_space<vmem>>, vector<5x768xf32>
    tpu.vector_store %arg11[%c27, %c0_41], %67 {strides = array<i32>} : memref<32x768xf32, #tpu.memory_space<vmem>>, vector<5x768xf32>,
    %c0_42 = arith.constant 0 : index
    %c0_43 = arith.constant 0 : index
    %69 = vector.load %arg4[%c0_42, %c0_43] : memref<32x32xbf16, #tpu.memory_space<vmem>>, vector<32x32xbf16>
    %c0_44 = arith.constant 0 : index
    %c0_45 = arith.constant 0 : index
    %70 = vector.load %arg11[%c0_44, %c0_45] : memref<32x768xf32, #tpu.memory_space<vmem>>, vector<32x768xf32>
    %71 = arith.truncf %70 : vector<32x768xf32> to vector<32x768xbf16>
    %cst_46 = arith.constant dense<0.000000e+00> : vector<32x768xf32>
    %72 = tpu.matmul %69, %71, %cst_46 {dimension_numbers = #tpu.dot_dimension_numbers<[1], [0], [0], [1], [0, 0, 1, 1], [], []>} : vector<32x32xbf16>, vector<32x768xbf16>, vector<32x768xf32> -> vector<32x768xf32>
    %c0_47 = arith.constant 0 : index
    %c0_48 = arith.constant 0 : index
    %73 = vector.load %arg5[%c0_47, %c0_48] : memref<32x1xf32, #tpu.memory_space<vmem>>, vector<32x1xf32>
    %74 = vector.broadcast %73 : vector<32x1xf32> to vector<32x768xf32>
    %75 = arith.addf %72, %74 : vector<32x768xf32>
    %cst_49 = arith.constant 0.000000e+00 : f32
    %76 = vector.broadcast %cst_49 : f32 to vector<32x768xf32>
    %77 = arith.maximumf %75, %76 : vector<32x768xf32>
    %78 = vector.extract_strided_slice %77 {offsets = [0, 0], sizes = [32, 256], strides = [1, 1]} : vector<32x768xf32> to vector<32x256xf32>
    %cst_50 = arith.constant dense<0.000000e+00> : vector<32xf32>
    %79 = vector.multi_reduction <add>, %78, %cst_50 [1] : vector<32x256xf32> to vector<32xf32>
    %80 = vector.shape_cast %79 : vector<32xf32> to vector<32x1xf32>
    %cst_51 = arith.constant 2.560000e+02 : f32
    %81 = vector.broadcast %cst_51 : f32 to vector<32x1xf32>
    %82 = arith.divf %80, %81 : vector<32x1xf32>
    %83 = arith.mulf %78, %78 : vector<32x256xf32>
    %cst_52 = arith.constant dense<0.000000e+00> : vector<32xf32>
    %84 = vector.multi_reduction <add>, %83, %cst_52 [1] : vector<32x256xf32> to vector<32xf32>
    %85 = vector.shape_cast %84 : vector<32xf32> to vector<32x1xf32>
    %cst_53 = arith.constant 2.560000e+02 : f32
    %86 = vector.broadcast %cst_53 : f32 to vector<32x1xf32>
    %87 = arith.divf %85, %86 : vector<32x1xf32>
    %88 = arith.mulf %82, %82 : vector<32x1xf32>
    %89 = arith.subf %87, %88 : vector<32x1xf32>
    %90 = vector.broadcast %82 : vector<32x1xf32> to vector<32x256xf32>
    %91 = arith.subf %78, %90 : vector<32x256xf32>
    %cst_54 = arith.constant 9.99999974E-6 : f32
    %92 = vector.broadcast %cst_54 : f32 to vector<32x1xf32>
    %93 = arith.addf %89, %92 : vector<32x1xf32>
    %94 = math.rsqrt %93 : vector<32x1xf32>
    %95 = vector.broadcast %94 : vector<32x1xf32> to vector<32x256xf32>
    %96 = arith.mulf %91, %95 : vector<32x256xf32>
    %97 = vector.extract_strided_slice %77 {offsets = [0, 256], sizes = [32, 256], strides = [1, 1]} : vector<32x768xf32> to vector<32x256xf32>
    %cst_55 = arith.constant dense<0.000000e+00> : vector<32xf32>
    %98 = vector.multi_reduction <add>, %97, %cst_55 [1] : vector<32x256xf32> to vector<32xf32>
    %99 = vector.shape_cast %98 : vector<32xf32> to vector<32x1xf32>
    %cst_56 = arith.constant 2.560000e+02 : f32
    %100 = vector.broadcast %cst_56 : f32 to vector<32x1xf32>
    %101 = arith.divf %99, %100 : vector<32x1xf32>
    %102 = arith.mulf %97, %97 : vector<32x256xf32>
    %cst_57 = arith.constant dense<0.000000e+00> : vector<32xf32>
    %103 = vector.multi_reduction <add>, %102, %cst_57 [1] : vector<32x256xf32> to vector<32xf32>
    %104 = vector.shape_cast %103 : vector<32xf32> to vector<32x1xf32>
    %cst_58 = arith.constant 2.560000e+02 : f32
    %105 = vector.broadcast %cst_58 : f32 to vector<32x1xf32>
    %106 = arith.divf %104, %105 : vector<32x1xf32>
    %107 = arith.mulf %101, %101 : vector<32x1xf32>
    %108 = arith.subf %106, %107 : vector<32x1xf32>
    %109 = vector.broadcast %101 : vector<32x1xf32> to vector<32x256xf32>
    %110 = arith.subf %97, %109 : vector<32x256xf32>
    %cst_59 = arith.constant 9.99999974E-6 : f32
    %111 = vector.broadcast %cst_59 : f32 to vector<32x1xf32>
    %112 = arith.addf %108, %111 : vector<32x1xf32>
    %113 = math.rsqrt %112 : vector<32x1xf32>
    %114 = vector.broadcast %113 : vector<32x1xf32> to vector<32x256xf32>
    %115 = arith.mulf %110, %114 : vector<32x256xf32>
    %116 = arith.subf %96, %115 : vector<32x256xf32>
    %117 = arith.mulf %116, %116 : vector<32x256xf32>
    %cst_60 = arith.constant dense<0.000000e+00> : vector<256xf32>
    %118 = vector.multi_reduction <add>, %117, %cst_60 [0] : vector<32x256xf32> to vector<256xf32>
    %119 = vector.shape_cast %118 : vector<256xf32> to vector<1x256xf32>
    %c0_61 = arith.constant 0 : index
    %c0_62 = arith.constant 0 : index
    %c0_63 = arith.constant 0 : index
    %120 = vector.load %arg8[%c0_61, %c0_62, %c0_63] : memref<1x1x256xf32, #tpu.memory_space<vmem>>, vector<1x1x256xf32>
    %121 = vector.shape_cast %120 : vector<1x1x256xf32> to vector<1x256xf32>
    %122 = vector.shape_cast %119 : vector<1x256xf32> to vector<1x1x256xf32>
    tpu.vector_store %arg8[%c0_61, %c0_62, %c0_63], %122 {strides = array<i32>} : memref<1x1x256xf32, #tpu.memory_space<vmem>>, vector<1x1x256xf32>,
    %123 = vector.extract_strided_slice %77 {offsets = [0, 512], sizes = [32, 256], strides = [1, 1]} : vector<32x768xf32> to vector<32x256xf32>
    %cst_64 = arith.constant dense<0.000000e+00> : vector<32xf32>
    %124 = vector.multi_reduction <add>, %123, %cst_64 [1] : vector<32x256xf32> to vector<32xf32>
    %125 = vector.shape_cast %124 : vector<32xf32> to vector<32x1xf32>
    %cst_65 = arith.constant 2.560000e+02 : f32
    %126 = vector.broadcast %cst_65 : f32 to vector<32x1xf32>
    %127 = arith.divf %125, %126 : vector<32x1xf32>
    %128 = arith.mulf %123, %123 : vector<32x256xf32>
    %cst_66 = arith.constant dense<0.000000e+00> : vector<32xf32>
    %129 = vector.multi_reduction <add>, %128, %cst_66 [1] : vector<32x256xf32> to vector<32xf32>
    %130 = vector.shape_cast %129 : vector<32xf32> to vector<32x1xf32>
    %cst_67 = arith.constant 2.560000e+02 : f32
    %131 = vector.broadcast %cst_67 : f32 to vector<32x1xf32>
    %132 = arith.divf %130, %131 : vector<32x1xf32>
    %133 = arith.mulf %127, %127 : vector<32x1xf32>
    %134 = arith.subf %132, %133 : vector<32x1xf32>
    %135 = vector.broadcast %127 : vector<32x1xf32> to vector<32x256xf32>
    %136 = arith.subf %123, %135 : vector<32x256xf32>
    %cst_68 = arith.constant 9.99999974E-6 : f32
    %137 = vector.broadcast %cst_68 : f32 to vector<32x1xf32>
    %138 = arith.addf %134, %137 : vector<32x1xf32>
    %139 = math.rsqrt %138 : vector<32x1xf32>
    %140 = vector.broadcast %139 : vector<32x1xf32> to vector<32x256xf32>
    %141 = arith.mulf %136, %140 : vector<32x256xf32>
    %142 = arith.subf %96, %141 : vector<32x256xf32>
    %143 = arith.mulf %142, %142 : vector<32x256xf32>
    %cst_69 = arith.constant dense<0.000000e+00> : vector<256xf32>
    %144 = vector.multi_reduction <add>, %143, %cst_69 [0] : vector<32x256xf32> to vector<256xf32>
    %145 = vector.shape_cast %144 : vector<256xf32> to vector<1x256xf32>
    %c0_70 = arith.constant 0 : index
    %c0_71 = arith.constant 0 : index
    %c0_72 = arith.constant 0 : index
    %146 = vector.load %arg9[%c0_70, %c0_71, %c0_72] : memref<1x1x256xf32, #tpu.memory_space<vmem>>, vector<1x1x256xf32>
    %147 = vector.shape_cast %146 : vector<1x1x256xf32> to vector<1x256xf32>
    %148 = vector.shape_cast %145 : vector<1x256xf32> to vector<1x1x256xf32>
    tpu.vector_store %arg9[%c0_70, %c0_71, %c0_72], %148 {strides = array<i32>} : memref<1x1x256xf32, #tpu.memory_space<vmem>>, vector<1x1x256xf32>,
    return
  }
  func.func @transform_0(%arg0: i32) -> (i32, i32, i32) {
    %c0_i32 = arith.constant 0 : i32
    %c0_i32_0 = arith.constant 0 : i32
    %c0_i32_1 = arith.constant 0 : i32
    return %arg0, %c0_i32, %c0_i32_0 : i32, i32, i32
  }
  func.func @transform_1(%arg0: i32) -> (i32, i32, i32) {
    %c0_i32 = arith.constant 0 : i32
    %c0_i32_0 = arith.constant 0 : i32
    %c0_i32_1 = arith.constant 0 : i32
    return %arg0, %c0_i32, %c0_i32_0 : i32, i32, i32
  }
  func.func @transform_2(%arg0: i32) -> (i32, i32, i32) {
    %c0_i32 = arith.constant 0 : i32
    %c0_i32_0 = arith.constant 0 : i32
    %c0_i32_1 = arith.constant 0 : i32
    return %arg0, %c0_i32, %c0_i32_0 : i32, i32, i32
  }
  func.func @transform_3(%arg0: i32) -> (i32, i32) {
    %c0_i32 = arith.constant 0 : i32
    %c0_i32_0 = arith.constant 0 : i32
    %c0_i32_1 = arith.constant 0 : i32
    return %c0_i32, %c0_i32_0 : i32, i32
  }
  func.func @transform_4(%arg0: i32) -> (i32, i32) {
    %c0_i32 = arith.constant 0 : i32
    %c0_i32_0 = arith.constant 0 : i32
    %c0_i32_1 = arith.constant 0 : i32
    return %c0_i32, %c0_i32_0 : i32, i32
  }
  func.func @transform_5(%arg0: i32) -> (i32, i32) {
    %c0_i32 = arith.constant 0 : i32
    %c0_i32_0 = arith.constant 0 : i32
    %c0_i32_1 = arith.constant 0 : i32
    return %c0_i32, %c0_i32_0 : i32, i32
  }
  func.func @transform_6(%arg0: i32) -> (i32, i32) {
    %c0_i32 = arith.constant 0 : i32
    %c0_i32_0 = arith.constant 0 : i32
    %c0_i32_1 = arith.constant 0 : i32
    return %c0_i32, %c0_i32_0 : i32, i32
  }
  func.func @transform_7(%arg0: i32) -> (i32, i32, i32) {
    %c0_i32 = arith.constant 0 : i32
    %c0_i32_0 = arith.constant 0 : i32
    %c0_i32_1 = arith.constant 0 : i32
    return %arg0, %c0_i32, %c0_i32_0 : i32, i32, i32
  }
  func.func @transform_8(%arg0: i32) -> (i32, i32, i32) {
    %c0_i32 = arith.constant 0 : i32
    %c0_i32_0 = arith.constant 0 : i32
    %c0_i32_1 = arith.constant 0 : i32
    return %arg0, %c0_i32, %c0_i32_0 : i32, i32, i32
  }
}

</mosaic_0001>

<llo_original>
// kernel: tpu_custom_call.1
$region0: #{tpu_custom_call.1}
  #allocation0 [shape = 'u32[]', space=smem, size = 0x4, offset = 0x4, fixed_abs, tag = 'smem constant byte address 0x4 - core index']
  #allocation1 [shape = 'u32[144,128]{1,0:T(1,128)}', space=vmem, size = 0x12000, scoped, tag = 'internal scratch']
  #allocation2 [shape = 'f32[3,768]{1,0:T(4,128)}', space=vmem, size = 0x3000, scoped, tag = 'scratch operand']
  #allocation3 [shape = 'f32[32,768]{1,0:T(8,128)}', space=vmem, size = 0x18000, scoped, tag = 'scratch operand']
  %s0 = inlined_call_operand.vmem [shape: f32[2,3,256], index: 0, kind: input, shape index: {}]
  %s1 = inlined_call_operand.vmem [shape: f32[2,3,256], index: 1, kind: input, shape index: {}]
  %s2 = inlined_call_operand.vmem [shape: f32[2,3,256], index: 2, kind: input, shape index: {}]
  %s3 = inlined_call_operand.vmem [shape: bf16[32,32], index: 3, kind: input, shape index: {}]
  %s4 = inlined_call_operand.vmem [shape: f32[32,1], index: 4, kind: input, shape index: {}]
  %s5 = inlined_call_operand.vmem [shape: f32[3,1], index: 5, kind: input, shape index: {}]
  %s6 = inlined_call_operand.vmem [shape: f32[9,768], index: 6, kind: input, shape index: {}]
  %s7 = inlined_call_operand.hbm [shape: f32[2,1,256], index: 7, kind: output, shape index: {0}]
  %s8 = inlined_call_operand.hbm [shape: f32[2,1,256], index: 8, kind: output, shape index: {1}]
  %9 = xla_tuple %s7, %s8
  %s10 = sld [smem:[#allocation0]]
  $region69: #{tpu_custom_call.1} parent=0
    _
  %s12 = ssub.s32 1, %s10
  %s13 = scalar_select 0, %s12, %s10
  $region1: #{tpu_custom_call.1} parent=0
    #allocation4 [shape = 'u8[2048]{0}', space=vmem, size = 0x800, scoped, tag = 'output window, operand 0']
    #allocation5 [shape = 's32[2]{0}', space=sflag, size = 0x8, scoped, tag = 'scoped memory for tpu_custom_call.1']
    #allocation6 [shape = 'u8[2048]{0}', space=vmem, size = 0x800, scoped, tag = 'output window, operand 1']
    #allocation7 [shape = 's32[2]{0}', space=sflag, size = 0x8, scoped, tag = 'scoped memory for tpu_custom_call.1']
    %14 = vsyncpa [#allocation5], 0
    %s15 = scalar_lea.sflag [#allocation5], 1
    %16 = vsyncpa %s15, 0
    %17 = vsyncpa [#allocation7], 0
    %s18 = scalar_lea.sflag [#allocation7], 1
    %19 = vsyncpa %s18, 0
    loop: start=0, step=1, limit=4
    $region2: #{tpu_custom_call.1} parent=1 // loop_pre_header
      _
    $region3: #{tpu_custom_call.1} parent=1 // loop_header
      %s21 = sphi 0, %s25
      %p22 = scmp.ge.s32.totalorder %s21, 4
      %s31 = sphi 0, %s33
      %s34 = sphi 0, %s31
      %s35 = sphi 0, %s34
      %s51 = sphi 0, %s35
      %s57 = sphi 0, %s59
      %s60 = sphi 0, %s57
      %s61 = sphi 0, %s60
      %s77 = sphi 0, %s61
      %s83 = sphi 0, %s85
      %s86 = sphi 0, %s83
      %s87 = sphi 0, %s86
      %s103 = sphi 0, %s87
      %s107 = sphi 0, %s107
      %s109 = sphi 0, %s107
      %s110 = sphi 0, %s109
      %s124 = sphi 0, %s110
      %s128 = sphi 0, %s128
      %s130 = sphi 0, %s128
      %s131 = sphi 0, %s130
      %s145 = sphi 0, %s131
      %s149 = sphi 0, %s149
      %s151 = sphi 0, %s149
      %s152 = sphi 0, %s151
      %s166 = sphi 0, %s152
      %s170 = sphi 0, %s170
      %s172 = sphi 0, %s170
      %s173 = sphi 0, %s172
      %s187 = sphi 0, %s173
      %s193 = sphi 0, %s195
      %s196 = sphi 0, %s193
      %s197 = sphi 0, %s196
      %s213 = sphi 0, %s197
      %s219 = sphi 0, %s221
      %s222 = sphi 0, %s219
      %s223 = sphi 0, %s222
      %s239 = sphi 0, %s223
    $region4: #{tpu_custom_call.1} parent=1 // loop_header_branch
      %24 = sbr.rel (%p22) target = $region8
    $region5: #{tpu_custom_call.1} parent=1 // loop_body
      %s26 = ssub.s32 %s21, 1
      %s27 = ssub.s32 %s21, 2
      %s28 = sadd.s32 %s21, 1
      %s29 = ssub.s32 %s21, %s28
      %p30 = scmp.eq.s32.totalorder %s29, 0
      %s32 = sadd.s32 %s31, 1
      %s33 = scalar_select %p30, %s31, %s32
      %p36 = pneg %p30
      %p37 = scmp.eq.s32.totalorder %s21, 1
      %p38 = por %p36, %p37
      %p39 = scmp.ne.s32.totalorder %s31, %s34
      %p40 = scmp.eq.s32.totalorder %s21, 0
      %p41 = por %p39, %p40
      %p42 = scmp.ne.s32.totalorder %s31, %s34
      %p43 = scmp.eq.s32.totalorder %s26, 1
      %p44 = por %p42, %p43
      %p45 = scmp.ne.s32.totalorder %s34, %s35
      %p46 = scmp.eq.s32.totalorder %s26, 0
      %p47 = por %p45, %p46
      %p48 = scmp.ne.s32.totalorder %s34, %s35
      %p49 = scmp.eq.s32.totalorder %s27, 1
      %p50 = por %p48, %p49
      %p52 = scmp.ne.s32.totalorder %s35, %s51
      %p53 = scmp.eq.s32.totalorder %s27, 0
      %p54 = por %p52, %p53
      %s55 = ssub.s32 %s21, %s28
      %p56 = scmp.eq.s32.totalorder %s55, 0
      %s58 = sadd.s32 %s57, 1
      %s59 = scalar_select %p56, %s57, %s58
      %p62 = pneg %p56
      %p63 = scmp.eq.s32.totalorder %s21, 1
      %p64 = por %p62, %p63
      %p65 = scmp.ne.s32.totalorder %s57, %s60
      %p66 = scmp.eq.s32.totalorder %s21, 0
      %p67 = por %p65, %p66
      %p68 = scmp.ne.s32.totalorder %s57, %s60
      %p69 = scmp.eq.s32.totalorder %s26, 1
      %p70 = por %p68, %p69
      %p71 = scmp.ne.s32.totalorder %s60, %s61
      %p72 = scmp.eq.s32.totalorder %s26, 0
      %p73 = por %p71, %p72
      %p74 = scmp.ne.s32.totalorder %s60, %s61
      %p75 = scmp.eq.s32.totalorder %s27, 1
      %p76 = por %p74, %p75
      %p78 = scmp.ne.s32.totalorder %s61, %s77
      %p79 = scmp.eq.s32.totalorder %s27, 0
      %p80 = por %p78, %p79
      %s81 = ssub.s32 %s21, %s28
      %p82 = scmp.eq.s32.totalorder %s81, 0
      %s84 = sadd.s32 %s83, 1
      %s85 = scalar_select %p82, %s83, %s84
      %p88 = pneg %p82
      %p89 = scmp.eq.s32.totalorder %s21, 1
      %p90 = por %p88, %p89
      %p91 = scmp.ne.s32.totalorder %s83, %s86
      %p92 = scmp.eq.s32.totalorder %s21, 0
      %p93 = por %p91, %p92
      %p94 = scmp.ne.s32.totalorder %s83, %s86
      %p95 = scmp.eq.s32.totalorder %s26, 1
      %p96 = por %p94, %p95
      %p97 = scmp.ne.s32.totalorder %s86, %s87
      %p98 = scmp.eq.s32.totalorder %s26, 0
      %p99 = por %p97, %p98
      %p100 = scmp.ne.s32.totalorder %s86, %s87
      %p101 = scmp.eq.s32.totalorder %s27, 1
      %p102 = por %p100, %p101
      %p104 = scmp.ne.s32.totalorder %s87, %s103
      %p105 = scmp.eq.s32.totalorder %s27, 0
      %p106 = por %p104, %p105
      %s108 = sadd.s32 %s107, 1
      %p111 = scmp.eq.s32.totalorder %s21, 1
      %p112 = scmp.ne.s32.totalorder %s107, %s109
      %p113 = scmp.eq.s32.totalorder %s21, 0
      %p114 = por %p112, %p113
      %p115 = scmp.ne.s32.totalorder %s107, %s109
      %p116 = scmp.eq.s32.totalorder %s26, 1
      %p117 = por %p115, %p116
      %p118 = scmp.ne.s32.totalorder %s109, %s110
      %p119 = scmp.eq.s32.totalorder %s26, 0
      %p120 = por %p118, %p119
      %p121 = scmp.ne.s32.totalorder %s109, %s110
      %p122 = scmp.eq.s32.totalorder %s27, 1
      %p123 = por %p121, %p122
      %p125 = scmp.ne.s32.totalorder %s110, %s124
      %p126 = scmp.eq.s32.totalorder %s27, 0
      %p127 = por %p125, %p126
      %s129 = sadd.s32 %s128, 1
      %p132 = scmp.eq.s32.totalorder %s21, 1
      %p133 = scmp.ne.s32.totalorder %s128, %s130
      %p134 = scmp.eq.s32.totalorder %s21, 0
      %p135 = por %p133, %p134
      %p136 = scmp.ne.s32.totalorder %s128, %s130
      %p137 = scmp.eq.s32.totalorder %s26, 1
      %p138 = por %p136, %p137
      %p139 = scmp.ne.s32.totalorder %s130, %s131
      %p140 = scmp.eq.s32.totalorder %s26, 0
      %p141 = por %p139, %p140
      %p142 = scmp.ne.s32.totalorder %s130, %s131
      %p143 = scmp.eq.s32.totalorder %s27, 1
      %p144 = por %p142, %p143
      %p146 = scmp.ne.s32.totalorder %s131, %s145
      %p147 = scmp.eq.s32.totalorder %s27, 0
      %p148 = por %p146, %p147
      %s150 = sadd.s32 %s149, 1
      %p153 = scmp.eq.s32.totalorder %s21, 1
      %p154 = scmp.ne.s32.totalorder %s149, %s151
      %p155 = scmp.eq.s32.totalorder %s21, 0
      %p156 = por %p154, %p155
      %p157 = scmp.ne.s32.totalorder %s149, %s151
      %p158 = scmp.eq.s32.totalorder %s26, 1
      %p159 = por %p157, %p158
      %p160 = scmp.ne.s32.totalorder %s151, %s152
      %p161 = scmp.eq.s32.totalorder %s26, 0
      %p162 = por %p160, %p161
      %p163 = scmp.ne.s32.totalorder %s151, %s152
      %p164 = scmp.eq.s32.totalorder %s27, 1
      %p165 = por %p163, %p164
      %p167 = scmp.ne.s32.totalorder %s152, %s166
      %p168 = scmp.eq.s32.totalorder %s27, 0
      %p169 = por %p167, %p168
      %s171 = sadd.s32 %s170, 1
      %p174 = scmp.eq.s32.totalorder %s21, 1
      %p175 = scmp.ne.s32.totalorder %s170, %s172
      %p176 = scmp.eq.s32.totalorder %s21, 0
      %p177 = por %p175, %p176
      %p178 = scmp.ne.s32.totalorder %s170, %s172
      %p179 = scmp.eq.s32.totalorder %s26, 1
      %p180 = por %p178, %p179
      %p181 = scmp.ne.s32.totalorder %s172, %s173
      %p182 = scmp.eq.s32.totalorder %s26, 0
      %p183 = por %p181, %p182
      %p184 = scmp.ne.s32.totalorder %s172, %s173
      %p185 = scmp.eq.s32.totalorder %s27, 1
      %p186 = por %p184, %p185
      %p188 = scmp.ne.s32.totalorder %s173, %s187
      %p189 = scmp.eq.s32.totalorder %s27, 0
      %p190 = por %p188, %p189
      %s191 = ssub.s32 %s21, %s28
      %p192 = scmp.eq.s32.totalorder %s191, 0
      %s194 = sadd.s32 %s193, 1
      %s195 = scalar_select %p192, %s193, %s194
      %p198 = pneg %p192
      %p199 = scmp.eq.s32.totalorder %s21, 1
      %p200 = por %p198, %p199
      %p201 = scmp.ne.s32.totalorder %s193, %s196
      %p202 = scmp.eq.s32.totalorder %s21, 0
      %p203 = por %p201, %p202
      %p204 = scmp.ne.s32.totalorder %s193, %s196
      %p205 = scmp.eq.s32.totalorder %s26, 1
      %p206 = por %p204, %p205
      %p207 = scmp.ne.s32.totalorder %s196, %s197
      %p208 = scmp.eq.s32.totalorder %s26, 0
      %p209 = por %p207, %p208
      %p210 = scmp.ne.s32.totalorder %s196, %s197
      %p211 = scmp.eq.s32.totalorder %s27, 1
      %p212 = por %p210, %p211
      %p214 = scmp.ne.s32.totalorder %s197, %s213
      %p215 = scmp.eq.s32.totalorder %s27, 0
      %p216 = por %p214, %p215
      %s217 = ssub.s32 %s21, %s28
      %p218 = scmp.eq.s32.totalorder %s217, 0
      %s220 = sadd.s32 %s219, 1
      %s221 = scalar_select %p218, %s219, %s220
      %p224 = pneg %p218
      %p225 = scmp.eq.s32.totalorder %s21, 1
      %p226 = por %p224, %p225
      %p227 = scmp.ne.s32.totalorder %s219, %s222
      %p228 = scmp.eq.s32.totalorder %s21, 0
      %p229 = por %p227, %p228
      %p230 = scmp.ne.s32.totalorder %s219, %s222
      %p231 = scmp.eq.s32.totalorder %s26, 1
      %p232 = por %p230, %p231
      %p233 = scmp.ne.s32.totalorder %s222, %s223
      %p234 = scmp.eq.s32.totalorder %s26, 0
      %p235 = por %p233, %p234
      %p236 = scmp.ne.s32.totalorder %s222, %s223
      %p237 = scmp.eq.s32.totalorder %s27, 1
      %p238 = por %p236, %p237
      %p240 = scmp.ne.s32.totalorder %s223, %s239
      %p241 = scmp.eq.s32.totalorder %s27, 0
      %p242 = por %p240, %p241
      %p243 = scmp.le.s32.totalorder 1, %s21
      %p244 = scmp.lt.s32.totalorder %s21, 3
      %p245 = pnand %p243, %p244
      %p246 = pneg %p245
      // Predicated region
      $region9: #{tpu_custom_call.1} parent=5 // pred_check
        _
      $region10: #{tpu_custom_call.1} parent=5 // pred_check_branch
        %248 = sbr.rel (%p245) target = $region12
      $region11: #{tpu_custom_call.1} parent=5 // pred_region
        %s249 = ssub.s32 %s21, 1
        // Predicated region
        $region13: #{tpu_custom_call.1} parent=11 // pred_check
          %p250 = pneg %p120
        $region14: #{tpu_custom_call.1} parent=11 // pred_check_branch
          %252 = sbr.rel (%p250) target = $region16
        $region15: #{tpu_custom_call.1} parent=11 // pred_region
          _
        $region16: #{tpu_custom_call.1} parent=11 // pred_fallthru
          _
        // Predicated region
        $region17: #{tpu_custom_call.1} parent=11 // pred_check
          %p253 = pneg %p141
        $region18: #{tpu_custom_call.1} parent=11 // pred_check_branch
          %255 = sbr.rel (%p253) target = $region20
        $region19: #{tpu_custom_call.1} parent=11 // pred_region
          _
        $region20: #{tpu_custom_call.1} parent=11 // pred_fallthru
          _
        // Predicated region
        $region21: #{tpu_custom_call.1} parent=11 // pred_check
          %p256 = pneg %p162
        $region22: #{tpu_custom_call.1} parent=11 // pred_check_branch
          %258 = sbr.rel (%p256) target = $region24
        $region23: #{tpu_custom_call.1} parent=11 // pred_region
          _
        $region24: #{tpu_custom_call.1} parent=11 // pred_fallthru
          _
        // Predicated region
        $region25: #{tpu_custom_call.1} parent=11 // pred_check
          %p259 = pneg %p183
        $region26: #{tpu_custom_call.1} parent=11 // pred_check_branch
          %261 = sbr.rel (%p259) target = $region28
        $region27: #{tpu_custom_call.1} parent=11 // pred_region
          _
        $region28: #{tpu_custom_call.1} parent=11 // pred_fallthru
          _
      $region12: #{tpu_custom_call.1} parent=5 // pred_fallthru
        _
      %p262 = scmp.lt.s32.totalorder %s21, 2
      // Predicated region
      $region29: #{tpu_custom_call.1} parent=5 // pred_check
        %p263 = pneg %p262
      $region30: #{tpu_custom_call.1} parent=5 // pred_check_branch
        %265 = sbr.rel (%p263) target = $region32
      $region31: #{tpu_custom_call.1} parent=5 // pred_region
        // Predicated region
        $region33: #{tpu_custom_call.1} parent=31 // pred_check
          %p266 = pneg %p41
        $region34: #{tpu_custom_call.1} parent=31 // pred_check_branch
          %268 = sbr.rel (%p266) target = $region36
        $region35: #{tpu_custom_call.1} parent=31 // pred_region
          %p269 = scmp.lt.s32.totalorder %s21, 1
          %s270 = scalar_select %p269, %s21, 1
          %s271 = smul.addr %s270, 2
          %s272 = smul.addr %s271, 4
          %s273 = scalar_lea.vmem %s0, %s272
        $region36: #{tpu_custom_call.1} parent=31 // pred_fallthru
          _
        // Predicated region
        $region37: #{tpu_custom_call.1} parent=31 // pred_check
          %p274 = pneg %p67
        $region38: #{tpu_custom_call.1} parent=31 // pred_check_branch
          %276 = sbr.rel (%p274) target = $region40
        $region39: #{tpu_custom_call.1} parent=31 // pred_region
          %p277 = scmp.lt.s32.totalorder %s21, 1
          %s278 = scalar_select %p277, %s21, 1
          %s279 = smul.addr %s278, 2
          %s280 = smul.addr %s279, 4
          %s281 = scalar_lea.vmem %s1, %s280
        $region40: #{tpu_custom_call.1} parent=31 // pred_fallthru
          _
        // Predicated region
        $region41: #{tpu_custom_call.1} parent=31 // pred_check
          %p282 = pneg %p93
        $region42: #{tpu_custom_call.1} parent=31 // pred_check_branch
          %284 = sbr.rel (%p282) target = $region44
        $region43: #{tpu_custom_call.1} parent=31 // pred_region
          %p285 = scmp.lt.s32.totalorder %s21, 1
          %s286 = scalar_select %p285, %s21, 1
          %s287 = smul.addr %s286, 2
          %s288 = smul.addr %s287, 4
          %s289 = scalar_lea.vmem %s2, %s288
        $region44: #{tpu_custom_call.1} parent=31 // pred_fallthru
          _
      $region32: #{tpu_custom_call.1} parent=5 // pred_fallthru
        _
      %p290 = scmp.le.s32.totalorder 1, %s21
      %p291 = scmp.lt.s32.totalorder %s21, 3
      %p292 = pnand %p290, %p291
      %p293 = pneg %p292
      // Predicated region
      $region45: #{tpu_custom_call.1} parent=5 // pred_check
        _
      $region46: #{tpu_custom_call.1} parent=5 // pred_check_branch
        %295 = sbr.rel (%p292) target = $region48
      $region47: #{tpu_custom_call.1} parent=5 // pred_region
        %s296 = ssub.s32 %s21, 1
        %p297 = scmp.lt.s32.totalorder %s26, 1
        %s298 = scalar_select %p297, %s26, 1
        %s299 = smul.addr %s298, 2
        %s300 = smul.addr %s299, 4
        %s301 = scalar_lea.vmem %s0, %s300
        %p302 = pneg %p47
        %p303 = pneg %p44
        %p304 = scmp.lt.s32.totalorder %s26, 1
        %s305 = scalar_select %p304, %s26, 1
        %s306 = smul.addr %s305, 2
        %s307 = smul.addr %s306, 4
        %s308 = scalar_lea.vmem %s1, %s307
        %p309 = pneg %p73
        %p310 = pneg %p70
        %p311 = scmp.lt.s32.totalorder %s26, 1
        %s312 = scalar_select %p311, %s26, 1
        %s313 = smul.addr %s312, 2
        %s314 = smul.addr %s313, 4
        %s315 = scalar_lea.vmem %s2, %s314
        %p316 = pneg %p99
        %p317 = pneg %p96
        %p318 = pneg %p120
        %p319 = pneg %p117
        %p320 = pneg %p141
        %p321 = pneg %p138
        %p322 = pneg %p162
        %p323 = pneg %p159
        %p324 = pneg %p183
        %p325 = pneg %p180
        %p326 = pneg %p209
        %p327 = pneg %p206
        %s328 = sand.u32 %s196, 1
        %s329 = scalar_lea.sflag [#allocation5], %s328
        %s330 = sand.u32 %s196, 1
        %s331 = smul.addr %s330, 2
        %s332 = scalar_lea.vmem [#allocation4], %s331
        %p333 = pneg %p235
        %p334 = pneg %p232
        %s335 = sand.u32 %s222, 1
        %s336 = scalar_lea.sflag [#allocation7], %s335
        %s337 = sand.u32 %s222, 1
        %s338 = smul.addr %s337, 2
        %s339 = scalar_lea.vmem [#allocation6], %s338
        %p340 = scmp.lt.s32.totalorder %s26, 1
        %s341 = scalar_select %p340, %s26, 1
        %s342 = smul.addr %s341, 2
        %s343 = smul.addr %s342, 4
        %s344 = scalar_lea.vmem %s0, %s343
        %p345 = scmp.lt.s32.totalorder %s26, 1
        %s346 = scalar_select %p345, %s26, 1
        %s347 = smul.addr %s346, 2
        %s348 = smul.addr %s347, 4
        %s349 = scalar_lea.vmem %s1, %s348
        %p350 = scmp.lt.s32.totalorder %s26, 1
        %s351 = scalar_select %p350, %s26, 1
        %s352 = smul.addr %s351, 2
        %s353 = smul.addr %s352, 4
        %s354 = scalar_lea.vmem %s2, %s353
        %v356 = vld [vmem:[%s5] sm:$0x7]
        %v357 = vld [vmem:[%s344] sm:$0x77]
        %v358 = vmul.f32 %v357, 127.5
        %360 = vset.pattern.permute.xlu0 0
        %361 = vperm.xlu0 %360, %v356
        %v362 = vpop.permute.xlu0 %361
        %v364 = vunpack.c.l.s4 839922192
        %v365 = vunpack.c.0.s8 %v364
        %v366 = vlaneseq
        %v367 = vshrl.u32 %v366, 7
        %v368 = vsub.s32 %v365, %v367
        %v369 = vrot.slane %v362, %v368
        %v371 = vadd.f32 %v358, %v369
        %372 = vst [vmem:[#allocation2] sm:$0x77] %v371
        %v373 = vld [vmem:[%s349] sm:$0x77]
        %v374 = vmul.f32 %v373, 127.5
        %v375 = vadd.f32 %v374, %v369
        %376 = vst [vmem:[#allocation2 + $0x8] sm:$0x77] %v375
        %v377 = vld [vmem:[%s354] sm:$0x77]
        %v378 = vmul.f32 %v377, 127.5
        %v379 = vadd.f32 %v378, %v369
        %380 = vst [vmem:[#allocation2 + $0x10] sm:$0x77] %v379
        %v381 = vld [vmem:[#allocation2] sm:$0x77]
        %v382 = vld [vmem:[#allocation2 + $0x8] sm:$0x77]
        %v383 = vld [vmem:[#allocation2 + $0x10] sm:$0x77]
        %v387 = vcombine.high %v381, %v381
        %v388 = vcombine.high %v382, %v382
        %v389 = vcombine.high %v383, %v383
        %393 = vrot.lane.b32.xlu0 %v381, 17
        %v394 = vpop.permute.xlu0 %393
        %395 = vrot.lane.b32.xlu0 %v387, 17
        %v396 = vpop.permute.xlu0 %395
        %397 = vrot.lane.b32.xlu0 %v382, 17
        %v398 = vpop.permute.xlu0 %397
        %399 = vrot.lane.b32.xlu0 %v388, 17
        %v400 = vpop.permute.xlu0 %399
        %401 = vrot.lane.b32.xlu0 %v383, 17
        %v402 = vpop.permute.xlu0 %401
        %403 = vrot.lane.b32.xlu0 %v389, 17
        %v404 = vpop.permute.xlu0 %403
        %v405 = vlaneseq
        %v406 = vand.u32 %v405, 127
        %vm407 = vcmp.lt.s32.totalorder %v406, 17
        %v408 = vsel %vm407, %v402, %v404
        %v409 = vsel %vm407, %v400, %v402
        %v410 = vsel %vm407, %v398, %v400
        %v411 = vsel %vm407, %v396, %v398
        %v412 = vsel %vm407, %v394, %v396
        %v413 = vsel %vm407, %v404, %v394
        %v414 = vld [vmem:[%s6] ss:$8 sm:$0xf]
        %v415 = vld [vmem:[%s6] ss:$8 sm:$0x30]
        %v416 = vor.u32 %v414, %v415
        %v418 = vlaneseq
        %v419 = vshrl.u32 %v418, 7
        %v420 = vsub.s32 0, %v419
        %v421 = vrot.slane %v416, %v420
        %v422 = vlaneseq
        %v423 = vshrl.u32 %v422, 7
        %v424 = vsub.s32 1, %v423
        %v425 = vrot.slane %v416, %v424
        %v426 = vlaneseq
        %v427 = vshrl.u32 %v426, 7
        %v428 = vsub.s32 2, %v427
        %v429 = vrot.slane %v416, %v428
        %v430 = vlaneseq
        %v431 = vshrl.u32 %v430, 7
        %v432 = vsub.s32 3, %v431
        %v433 = vrot.slane %v416, %v432
        %v434 = vlaneseq
        %v435 = vshrl.u32 %v434, 7
        %v436 = vsub.s32 4, %v435
        %v437 = vrot.slane %v416, %v436
        %v438 = vlaneseq
        %v439 = vshrl.u32 %v438, 7
        %v440 = vsub.s32 5, %v439
        %v441 = vrot.slane %v416, %v440
        %v448 = vmul.f32 %v413, %v421
        %v449 = vmul.f32 %v412, %v425
        %v450 = vmul.f32 %v411, %v429
        %v451 = vmul.f32 %v410, %v433
        %v452 = vmul.f32 %v409, %v437
        %v453 = vmul.f32 %v408, %v441
        %454 = vst [vmem:[#allocation3] sm:$0x7] %v448
        %455 = vst [vmem:[#allocation3 + $0x8] sm:$0x7] %v449
        %456 = vst [vmem:[#allocation3 + $0x10] sm:$0x7] %v450
        %457 = vst [vmem:[#allocation3 + $0x18] sm:$0x7] %v451
        %458 = vst [vmem:[#allocation3 + $0x20] sm:$0x7] %v452
        %459 = vst [vmem:[#allocation3 + $0x28] sm:$0x7] %v453
        %460 = vrot.lane.b32.xlu0 %v381, 16
        %v461 = vpop.permute.xlu0 %460
        %462 = vrot.lane.b32.xlu0 %v387, 16
        %v463 = vpop.permute.xlu0 %462
        %464 = vrot.lane.b32.xlu0 %v382, 16
        %v465 = vpop.permute.xlu0 %464
        %466 = vrot.lane.b32.xlu0 %v388, 16
        %v467 = vpop.permute.xlu0 %466
        %468 = vrot.lane.b32.xlu0 %v383, 16
        %v469 = vpop.permute.xlu0 %468
        %470 = vrot.lane.b32.xlu0 %v389, 16
        %v471 = vpop.permute.xlu0 %470
        %vm472 = vcmp.lt.s32.totalorder %v406, 16
        %v473 = vsel %vm472, %v469, %v471
        %v474 = vsel %vm472, %v467, %v469
        %v475 = vsel %vm472, %v465, %v467
        %v476 = vsel %vm472, %v463, %v465
        %v477 = vsel %vm472, %v461, %v463
        %v478 = vsel %vm472, %v471, %v461
        %s479 = scalar_lea.vmem %s6, 1
        %v480 = vld [vmem:[%s479] ss:$8 sm:$0xf]
        %v481 = vld [vmem:[%s479] ss:$8 sm:$0x30]
        %v482 = vor.u32 %v480, %v481
        %v484 = vlaneseq
        %v485 = vshrl.u32 %v484, 7
        %v486 = vsub.s32 0, %v485
        %v487 = vrot.slane %v482, %v486
        %v488 = vlaneseq
        %v489 = vshrl.u32 %v488, 7
        %v490 = vsub.s32 1, %v489
        %v491 = vrot.slane %v482, %v490
        %v492 = vlaneseq
        %v493 = vshrl.u32 %v492, 7
        %v494 = vsub.s32 2, %v493
        %v495 = vrot.slane %v482, %v494
        %v496 = vlaneseq
        %v497 = vshrl.u32 %v496, 7
        %v498 = vsub.s32 3, %v497
        %v499 = vrot.slane %v482, %v498
        %v500 = vlaneseq
        %v501 = vshrl.u32 %v500, 7
        %v502 = vsub.s32 4, %v501
        %v503 = vrot.slane %v482, %v502
        %v504 = vlaneseq
        %v505 = vshrl.u32 %v504, 7
        %v506 = vsub.s32 5, %v505
        %v507 = vrot.slane %v482, %v506
        %v514 = vmul.f32 %v478, %v487
        %v515 = vmul.f32 %v477, %v491
        %v516 = vmul.f32 %v476, %v495
        %v517 = vmul.f32 %v475, %v499
        %v518 = vmul.f32 %v474, %v503
        %v519 = vmul.f32 %v473, %v507
        %v526 = vrot.slane %v514, 5
        %v527 = vrot.slane %v515, 5
        %v528 = vrot.slane %v516, 5
        %v529 = vrot.slane %v517, 5
        %v530 = vrot.slane %v518, 5
        %v531 = vrot.slane %v519, 5
        %538 = vst [vmem:[#allocation3] sm:$0x38] %v526
        %539 = vst [vmem:[#allocation3 + $0x8] sm:$0x38] %v527
        %540 = vst [vmem:[#allocation3 + $0x10] sm:$0x38] %v528
        %541 = vst [vmem:[#allocation3 + $0x18] sm:$0x38] %v529
        %542 = vst [vmem:[#allocation3 + $0x20] sm:$0x38] %v530
        %543 = vst [vmem:[#allocation3 + $0x28] sm:$0x38] %v531
        %544 = vrot.lane.b32.xlu0 %v381, 15
        %v545 = vpop.permute.xlu0 %544
        %546 = vrot.lane.b32.xlu0 %v387, 15
        %v547 = vpop.permute.xlu0 %546
        %548 = vrot.lane.b32.xlu0 %v382, 15
        %v549 = vpop.permute.xlu0 %548
        %550 = vrot.lane.b32.xlu0 %v388, 15
        %v551 = vpop.permute.xlu0 %550
        %552 = vrot.lane.b32.xlu0 %v383, 15
        %v553 = vpop.permute.xlu0 %552
        %554 = vrot.lane.b32.xlu0 %v389, 15
        %v555 = vpop.permute.xlu0 %554
        %vm556 = vcmp.lt.s32.totalorder %v406, 15
        %v557 = vsel %vm556, %v553, %v555
        %v558 = vsel %vm556, %v551, %v553
        %v559 = vsel %vm556, %v549, %v551
        %v560 = vsel %vm556, %v547, %v549
        %v561 = vsel %vm556, %v545, %v547
        %v562 = vsel %vm556, %v555, %v545
        %s563 = scalar_lea.vmem %s6, 2
        %v564 = vld [vmem:[%s563] ss:$8 sm:$0xf]
        %v565 = vld [vmem:[%s563] ss:$8 sm:$0x30]
        %v566 = vor.u32 %v564, %v565
        %v568 = vlaneseq
        %v569 = vshrl.u32 %v568, 7
        %v570 = vsub.s32 0, %v569
        %v571 = vrot.slane %v566, %v570
        %v572 = vlaneseq
        %v573 = vshrl.u32 %v572, 7
        %v574 = vsub.s32 1, %v573
        %v575 = vrot.slane %v566, %v574
        %v576 = vlaneseq
        %v577 = vshrl.u32 %v576, 7
        %v578 = vsub.s32 2, %v577
        %v579 = vrot.slane %v566, %v578
        %v580 = vlaneseq
        %v581 = vshrl.u32 %v580, 7
        %v582 = vsub.s32 3, %v581
        %v583 = vrot.slane %v566, %v582
        %v584 = vlaneseq
        %v585 = vshrl.u32 %v584, 7
        %v586 = vsub.s32 4, %v585
        %v587 = vrot.slane %v566, %v586
        %v588 = vlaneseq
        %v589 = vshrl.u32 %v588, 7
        %v590 = vsub.s32 5, %v589
        %v591 = vrot.slane %v566, %v590
        %v598 = vmul.f32 %v562, %v571
        %v599 = vmul.f32 %v561, %v575
        %v600 = vmul.f32 %v560, %v579
        %v601 = vmul.f32 %v559, %v583
        %v602 = vmul.f32 %v558, %v587
        %v603 = vmul.f32 %v557, %v591
        %v610 = vrot.slane %v598, 2
        %v611 = vrot.slane %v599, 2
        %v612 = vrot.slane %v600, 2
        %v613 = vrot.slane %v601, 2
        %v614 = vrot.slane %v602, 2
        %v615 = vrot.slane %v603, 2
        %622 = vst [vmem:[#allocation3] sm:$0xc0] %v610
        %623 = vst [vmem:[#allocation3 + $0x8] sm:$0xc0] %v611
        %624 = vst [vmem:[#allocation3 + $0x10] sm:$0xc0] %v612
        %625 = vst [vmem:[#allocation3 + $0x18] sm:$0xc0] %v613
        %626 = vst [vmem:[#allocation3 + $0x20] sm:$0xc0] %v614
        %627 = vst [vmem:[#allocation3 + $0x28] sm:$0xc0] %v615
        %628 = vst [vmem:[#allocation3 + $0x30] sm:$0x1] %v610
        %629 = vst [vmem:[#allocation3 + $0x38] sm:$0x1] %v611
        %630 = vst [vmem:[#allocation3 + $0x40] sm:$0x1] %v612
        %631 = vst [vmem:[#allocation3 + $0x48] sm:$0x1] %v613
        %632 = vst [vmem:[#allocation3 + $0x50] sm:$0x1] %v614
        %633 = vst [vmem:[#allocation3 + $0x58] sm:$0x1] %v615
        %634 = vrot.lane.b32.xlu0 %v381, 1
        %v635 = vpop.permute.xlu0 %634
        %636 = vrot.lane.b32.xlu0 %v387, 1
        %v637 = vpop.permute.xlu0 %636
        %638 = vrot.lane.b32.xlu0 %v382, 1
        %v639 = vpop.permute.xlu0 %638
        %640 = vrot.lane.b32.xlu0 %v388, 1
        %v641 = vpop.permute.xlu0 %640
        %642 = vrot.lane.b32.xlu0 %v383, 1
        %v643 = vpop.permute.xlu0 %642
        %644 = vrot.lane.b32.xlu0 %v389, 1
        %v645 = vpop.permute.xlu0 %644
        %vm646 = vcmp.lt.s32.totalorder %v406, 1
        %v647 = vsel %vm646, %v643, %v645
        %v648 = vsel %vm646, %v641, %v643
        %v649 = vsel %vm646, %v639, %v641
        %v650 = vsel %vm646, %v637, %v639
        %v651 = vsel %vm646, %v635, %v637
        %v652 = vsel %vm646, %v645, %v635
        %s653 = scalar_lea.vmem %s6, 3
        %v654 = vld [vmem:[%s653] ss:$8 sm:$0xf]
        %v655 = vld [vmem:[%s653] ss:$8 sm:$0x30]
        %v656 = vor.u32 %v654, %v655
        %v658 = vlaneseq
        %v659 = vshrl.u32 %v658, 7
        %v660 = vsub.s32 0, %v659
        %v661 = vrot.slane %v656, %v660
        %v662 = vlaneseq
        %v663 = vshrl.u32 %v662, 7
        %v664 = vsub.s32 1, %v663
        %v665 = vrot.slane %v656, %v664
        %v666 = vlaneseq
        %v667 = vshrl.u32 %v666, 7
        %v668 = vsub.s32 2, %v667
        %v669 = vrot.slane %v656, %v668
        %v670 = vlaneseq
        %v671 = vshrl.u32 %v670, 7
        %v672 = vsub.s32 3, %v671
        %v673 = vrot.slane %v656, %v672
        %v674 = vlaneseq
        %v675 = vshrl.u32 %v674, 7
        %v676 = vsub.s32 4, %v675
        %v677 = vrot.slane %v656, %v676
        %v678 = vlaneseq
        %v679 = vshrl.u32 %v678, 7
        %v680 = vsub.s32 5, %v679
        %v681 = vrot.slane %v656, %v680
        %v688 = vmul.f32 %v652, %v661
        %v689 = vmul.f32 %v651, %v665
        %v690 = vmul.f32 %v650, %v669
        %v691 = vmul.f32 %v649, %v673
        %v692 = vmul.f32 %v648, %v677
        %v693 = vmul.f32 %v647, %v681
        %v700 = vrot.slane %v688, 7
        %v701 = vrot.slane %v689, 7
        %v702 = vrot.slane %v690, 7
        %v703 = vrot.slane %v691, 7
        %v704 = vrot.slane %v692, 7
        %v705 = vrot.slane %v693, 7
        %712 = vst [vmem:[#allocation3 + $0x30] sm:$0xe] %v700
        %713 = vst [vmem:[#allocation3 + $0x38] sm:$0xe] %v701
        %714 = vst [vmem:[#allocation3 + $0x40] sm:$0xe] %v702
        %715 = vst [vmem:[#allocation3 + $0x48] sm:$0xe] %v703
        %716 = vst [vmem:[#allocation3 + $0x50] sm:$0xe] %v704
        %717 = vst [vmem:[#allocation3 + $0x58] sm:$0xe] %v705
        %s718 = scalar_lea.vmem %s6, 4
        %v719 = vld [vmem:[%s718] ss:$8 sm:$0xf]
        %v720 = vld [vmem:[%s718] ss:$8 sm:$0x30]
        %v721 = vor.u32 %v719, %v720
        %v723 = vlaneseq
        %v724 = vshrl.u32 %v723, 7
        %v725 = vsub.s32 0, %v724
        %v726 = vrot.slane %v721, %v725
        %v727 = vlaneseq
        %v728 = vshrl.u32 %v727, 7
        %v729 = vsub.s32 1, %v728
        %v730 = vrot.slane %v721, %v729
        %v731 = vlaneseq
        %v732 = vshrl.u32 %v731, 7
        %v733 = vsub.s32 2, %v732
        %v734 = vrot.slane %v721, %v733
        %v735 = vlaneseq
        %v736 = vshrl.u32 %v735, 7
        %v737 = vsub.s32 3, %v736
        %v738 = vrot.slane %v721, %v737
        %v739 = vlaneseq
        %v740 = vshrl.u32 %v739, 7
        %v741 = vsub.s32 4, %v740
        %v742 = vrot.slane %v721, %v741
        %v743 = vlaneseq
        %v744 = vshrl.u32 %v743, 7
        %v745 = vsub.s32 5, %v744
        %v746 = vrot.slane %v721, %v745
        %v747 = vcombine.low %v726, %v730
        %v748 = vcombine.low %v734, %v738
        %v749 = vcombine.low %v742, %v746
        %v753 = vmul.f32 %v381, %v747
        %v754 = vmul.f32 %v382, %v748
        %v755 = vmul.f32 %v383, %v749
        %v759 = vcombine.low %v753, %v753
        %v760 = vcombine.low %v754, %v754
        %v761 = vcombine.low %v755, %v755
        %765 = vst [vmem:[#allocation3 + $0x30] sm:$0x70] %v759
        %766 = vst [vmem:[#allocation3 + $0x38] sm:$0x70] %v753
        %767 = vst [vmem:[#allocation3 + $0x40] sm:$0x70] %v760
        %768 = vst [vmem:[#allocation3 + $0x48] sm:$0x70] %v754
        %769 = vst [vmem:[#allocation3 + $0x50] sm:$0x70] %v761
        %770 = vst [vmem:[#allocation3 + $0x58] sm:$0x70] %v755
        %771 = vrot.lane.b32.xlu0 %v381, 127
        %v772 = vpop.permute.xlu0 %771
        %773 = vrot.lane.b32.xlu0 %v387, 127
        %v774 = vpop.permute.xlu0 %773
        %775 = vrot.lane.b32.xlu0 %v382, 127
        %v776 = vpop.permute.xlu0 %775
        %777 = vrot.lane.b32.xlu0 %v388, 127
        %v778 = vpop.permute.xlu0 %777
        %779 = vrot.lane.b32.xlu0 %v383, 127
        %v780 = vpop.permute.xlu0 %779
        %781 = vrot.lane.b32.xlu0 %v389, 127
        %v782 = vpop.permute.xlu0 %781
        %vm783 = vcmp.lt.s32.totalorder %v406, 127
        %v784 = vsel %vm783, %v780, %v782
        %v785 = vsel %vm783, %v778, %v780
        %v786 = vsel %vm783, %v776, %v778
        %v787 = vsel %vm783, %v774, %v776
        %v788 = vsel %vm783, %v772, %v774
        %v789 = vsel %vm783, %v782, %v772
        %s790 = scalar_lea.vmem %s6, 5
        %v791 = vld [vmem:[%s790] ss:$8 sm:$0xf]
        %v792 = vld [vmem:[%s790] ss:$8 sm:$0x30]
        %v793 = vor.u32 %v791, %v792
        %v795 = vlaneseq
        %v796 = vshrl.u32 %v795, 7
        %v797 = vsub.s32 0, %v796
        %v798 = vrot.slane %v793, %v797
        %v799 = vlaneseq
        %v800 = vshrl.u32 %v799, 7
        %v801 = vsub.s32 1, %v800
        %v802 = vrot.slane %v793, %v801
        %v803 = vlaneseq
        %v804 = vshrl.u32 %v803, 7
        %v805 = vsub.s32 2, %v804
        %v806 = vrot.slane %v793, %v805
        %v807 = vlaneseq
        %v808 = vshrl.u32 %v807, 7
        %v809 = vsub.s32 3, %v808
        %v810 = vrot.slane %v793, %v809
        %v811 = vlaneseq
        %v812 = vshrl.u32 %v811, 7
        %v813 = vsub.s32 4, %v812
        %v814 = vrot.slane %v793, %v813
        %v815 = vlaneseq
        %v816 = vshrl.u32 %v815, 7
        %v817 = vsub.s32 5, %v816
        %v818 = vrot.slane %v793, %v817
        %v825 = vmul.f32 %v788, %v798
        %v826 = vmul.f32 %v787, %v802
        %v827 = vmul.f32 %v786, %v806
        %v828 = vmul.f32 %v785, %v810
        %v829 = vmul.f32 %v784, %v814
        %v830 = vmul.f32 %v789, %v818
        %v837 = vrot.slane %v825, 1
        %v838 = vrot.slane %v826, 1
        %v839 = vrot.slane %v827, 1
        %v840 = vrot.slane %v828, 1
        %v841 = vrot.slane %v829, 1
        %v842 = vrot.slane %v830, 1
        %849 = vst [vmem:[#allocation3 + $0x30] sm:$0x80] %v837
        %850 = vst [vmem:[#allocation3 + $0x38] sm:$0x80] %v838
        %851 = vst [vmem:[#allocation3 + $0x40] sm:$0x80] %v839
        %852 = vst [vmem:[#allocation3 + $0x48] sm:$0x80] %v840
        %853 = vst [vmem:[#allocation3 + $0x50] sm:$0x80] %v841
        %854 = vst [vmem:[#allocation3 + $0x58] sm:$0x80] %v842
        %855 = vst [vmem:[#allocation3 + $0x60] sm:$0x3] %v837
        %856 = vst [vmem:[#allocation3 + $0x68] sm:$0x3] %v838
        %857 = vst [vmem:[#allocation3 + $0x70] sm:$0x3] %v839
        %858 = vst [vmem:[#allocation3 + $0x78] sm:$0x3] %v840
        %859 = vst [vmem:[#allocation3 + $0x80] sm:$0x3] %v841
        %860 = vst [vmem:[#allocation3 + $0x88] sm:$0x3] %v842
        %861 = vrot.lane.b32.xlu0 %v381, 113
        %v862 = vpop.permute.xlu0 %861
        %863 = vrot.lane.b32.xlu0 %v387, 113
        %v864 = vpop.permute.xlu0 %863
        %865 = vrot.lane.b32.xlu0 %v382, 113
        %v866 = vpop.permute.xlu0 %865
        %867 = vrot.lane.b32.xlu0 %v388, 113
        %v868 = vpop.permute.xlu0 %867
        %869 = vrot.lane.b32.xlu0 %v383, 113
        %v870 = vpop.permute.xlu0 %869
        %871 = vrot.lane.b32.xlu0 %v389, 113
        %v872 = vpop.permute.xlu0 %871
        %vm873 = vcmp.lt.s32.totalorder %v406, 113
        %v874 = vsel %vm873, %v870, %v872
        %v875 = vsel %vm873, %v868, %v870
        %v876 = vsel %vm873, %v866, %v868
        %v877 = vsel %vm873, %v864, %v866
        %v878 = vsel %vm873, %v862, %v864
        %v879 = vsel %vm873, %v872, %v862
        %s880 = scalar_lea.vmem %s6, 6
        %v881 = vld [vmem:[%s880] ss:$8 sm:$0xf]
        %v882 = vld [vmem:[%s880] ss:$8 sm:$0x30]
        %v883 = vor.u32 %v881, %v882
        %v885 = vlaneseq
        %v886 = vshrl.u32 %v885, 7
        %v887 = vsub.s32 0, %v886
        %v888 = vrot.slane %v883, %v887
        %v889 = vlaneseq
        %v890 = vshrl.u32 %v889, 7
        %v891 = vsub.s32 1, %v890
        %v892 = vrot.slane %v883, %v891
        %v893 = vlaneseq
        %v894 = vshrl.u32 %v893, 7
        %v895 = vsub.s32 2, %v894
        %v896 = vrot.slane %v883, %v895
        %v897 = vlaneseq
        %v898 = vshrl.u32 %v897, 7
        %v899 = vsub.s32 3, %v898
        %v900 = vrot.slane %v883, %v899
        %v901 = vlaneseq
        %v902 = vshrl.u32 %v901, 7
        %v903 = vsub.s32 4, %v902
        %v904 = vrot.slane %v883, %v903
        %v905 = vlaneseq
        %v906 = vshrl.u32 %v905, 7
        %v907 = vsub.s32 5, %v906
        %v908 = vrot.slane %v883, %v907
        %v915 = vmul.f32 %v878, %v888
        %v916 = vmul.f32 %v877, %v892
        %v917 = vmul.f32 %v876, %v896
        %v918 = vmul.f32 %v875, %v900
        %v919 = vmul.f32 %v874, %v904
        %v920 = vmul.f32 %v879, %v908
        %v927 = vrot.slane %v915, 6
        %v928 = vrot.slane %v916, 6
        %v929 = vrot.slane %v917, 6
        %v930 = vrot.slane %v918, 6
        %v931 = vrot.slane %v919, 6
        %v932 = vrot.slane %v920, 6
        %939 = vst [vmem:[#allocation3 + $0x60] sm:$0x1c] %v927
        %940 = vst [vmem:[#allocation3 + $0x68] sm:$0x1c] %v928
        %941 = vst [vmem:[#allocation3 + $0x70] sm:$0x1c] %v929
        %942 = vst [vmem:[#allocation3 + $0x78] sm:$0x1c] %v930
        %943 = vst [vmem:[#allocation3 + $0x80] sm:$0x1c] %v931
        %944 = vst [vmem:[#allocation3 + $0x88] sm:$0x1c] %v932
        %945 = vrot.lane.b32.xlu0 %v381, 112
        %v946 = vpop.permute.xlu0 %945
        %947 = vrot.lane.b32.xlu0 %v387, 112
        %v948 = vpop.permute.xlu0 %947
        %949 = vrot.lane.b32.xlu0 %v382, 112
        %v950 = vpop.permute.xlu0 %949
        %951 = vrot.lane.b32.xlu0 %v388, 112
        %v952 = vpop.permute.xlu0 %951
        %953 = vrot.lane.b32.xlu0 %v383, 112
        %v954 = vpop.permute.xlu0 %953
        %955 = vrot.lane.b32.xlu0 %v389, 112
        %v956 = vpop.permute.xlu0 %955
        %vm957 = vcmp.lt.s32.totalorder %v406, 112
        %v958 = vsel %vm957, %v954, %v956
        %v959 = vsel %vm957, %v952, %v954
        %v960 = vsel %vm957, %v950, %v952
        %v961 = vsel %vm957, %v948, %v950
        %v962 = vsel %vm957, %v946, %v948
        %v963 = vsel %vm957, %v956, %v946
        %s964 = scalar_lea.vmem %s6, 7
        %v965 = vld [vmem:[%s964] ss:$8 sm:$0xf]
        %v966 = vld [vmem:[%s964] ss:$8 sm:$0x30]
        %v967 = vor.u32 %v965, %v966
        %v969 = vlaneseq
        %v970 = vshrl.u32 %v969, 7
        %v971 = vsub.s32 0, %v970
        %v972 = vrot.slane %v967, %v971
        %v973 = vlaneseq
        %v974 = vshrl.u32 %v973, 7
        %v975 = vsub.s32 1, %v974
        %v976 = vrot.slane %v967, %v975
        %v977 = vlaneseq
        %v978 = vshrl.u32 %v977, 7
        %v979 = vsub.s32 2, %v978
        %v980 = vrot.slane %v967, %v979
        %v981 = vlaneseq
        %v982 = vshrl.u32 %v981, 7
        %v983 = vsub.s32 3, %v982
        %v984 = vrot.slane %v967, %v983
        %v985 = vlaneseq
        %v986 = vshrl.u32 %v985, 7
        %v987 = vsub.s32 4, %v986
        %v988 = vrot.slane %v967, %v987
        %v989 = vlaneseq
        %v990 = vshrl.u32 %v989, 7
        %v991 = vsub.s32 5, %v990
        %v992 = vrot.slane %v967, %v991
        %v999 = vmul.f32 %v962, %v972
        %v1000 = vmul.f32 %v961, %v976
        %v1001 = vmul.f32 %v960, %v980
        %v1002 = vmul.f32 %v959, %v984
        %v1003 = vmul.f32 %v958, %v988
        %v1004 = vmul.f32 %v963, %v992
        %v1011 = vrot.slane %v999, 3
        %v1012 = vrot.slane %v1000, 3
        %v1013 = vrot.slane %v1001, 3
        %v1014 = vrot.slane %v1002, 3
        %v1015 = vrot.slane %v1003, 3
        %v1016 = vrot.slane %v1004, 3
        %1023 = vst [vmem:[#allocation3 + $0x60] sm:$0xe0] %v1011
        %1024 = vst [vmem:[#allocation3 + $0x68] sm:$0xe0] %v1012
        %1025 = vst [vmem:[#allocation3 + $0x70] sm:$0xe0] %v1013
        %1026 = vst [vmem:[#allocation3 + $0x78] sm:$0xe0] %v1014
        %1027 = vst [vmem:[#allocation3 + $0x80] sm:$0xe0] %v1015
        %1028 = vst [vmem:[#allocation3 + $0x88] sm:$0xe0] %v1016
        %1029 = vrot.lane.b32.xlu0 %v381, 111
        %v1030 = vpop.permute.xlu0 %1029
        %1031 = vrot.lane.b32.xlu0 %v387, 111
        %v1032 = vpop.permute.xlu0 %1031
        %1033 = vrot.lane.b32.xlu0 %v382, 111
        %v1034 = vpop.permute.xlu0 %1033
        %1035 = vrot.lane.b32.xlu0 %v388, 111
        %v1036 = vpop.permute.xlu0 %1035
        %1037 = vrot.lane.b32.xlu0 %v383, 111
        %v1038 = vpop.permute.xlu0 %1037
        %1039 = vrot.lane.b32.xlu0 %v389, 111
        %v1040 = vpop.permute.xlu0 %1039
        %vm1041 = vcmp.lt.s32.totalorder %v406, 111
        %v1042 = vsel %vm1041, %v1038, %v1040
        %v1043 = vsel %vm1041, %v1036, %v1038
        %v1044 = vsel %vm1041, %v1034, %v1036
        %v1045 = vsel %vm1041, %v1032, %v1034
        %v1046 = vsel %vm1041, %v1030, %v1032
        %v1047 = vsel %vm1041, %v1040, %v1030
        %s1048 = scalar_lea.vmem %s6, 48
        %v1049 = vld [vmem:[%s1048] ss:$8 sm:$0xf]
        %v1050 = vld [vmem:[%s1048] ss:$8 sm:$0x30]
        %v1051 = vor.u32 %v1049, %v1050
        %v1053 = vlaneseq
        %v1054 = vshrl.u32 %v1053, 7
        %v1055 = vsub.s32 0, %v1054
        %v1056 = vrot.slane %v1051, %v1055
        %v1057 = vlaneseq
        %v1058 = vshrl.u32 %v1057, 7
        %v1059 = vsub.s32 1, %v1058
        %v1060 = vrot.slane %v1051, %v1059
        %v1061 = vlaneseq
        %v1062 = vshrl.u32 %v1061, 7
        %v1063 = vsub.s32 2, %v1062
        %v1064 = vrot.slane %v1051, %v1063
        %v1065 = vlaneseq
        %v1066 = vshrl.u32 %v1065, 7
        %v1067 = vsub.s32 3, %v1066
        %v1068 = vrot.slane %v1051, %v1067
        %v1069 = vlaneseq
        %v1070 = vshrl.u32 %v1069, 7
        %v1071 = vsub.s32 4, %v1070
        %v1072 = vrot.slane %v1051, %v1071
        %v1073 = vlaneseq
        %v1074 = vshrl.u32 %v1073, 7
        %v1075 = vsub.s32 5, %v1074
        %v1076 = vrot.slane %v1051, %v1075
        %v1083 = vmul.f32 %v1046, %v1056
        %v1084 = vmul.f32 %v1045, %v1060
        %v1085 = vmul.f32 %v1044, %v1064
        %v1086 = vmul.f32 %v1043, %v1068
        %v1087 = vmul.f32 %v1042, %v1072
        %v1088 = vmul.f32 %v1047, %v1076
        %1089 = vst [vmem:[#allocation3 + $0x90] sm:$0x7] %v1083
        %1090 = vst [vmem:[#allocation3 + $0x98] sm:$0x7] %v1084
        %1091 = vst [vmem:[#allocation3 + $0xa0] sm:$0x7] %v1085
        %1092 = vst [vmem:[#allocation3 + $0xa8] sm:$0x7] %v1086
        %1093 = vst [vmem:[#allocation3 + $0xb0] sm:$0x7] %v1087
        %1094 = vst [vmem:[#allocation3 + $0xb8] sm:$0x7] %v1088
        %1095 = vst [vmem:[#allocation3 + $0x90] sm:$0xf8] 0.0
        %1096 = vst [vmem:[#allocation3 + $0x98] sm:$0xf8] 0.0
        %1097 = vst [vmem:[#allocation3 + $0xa0] sm:$0xf8] 0.0
        %1098 = vst [vmem:[#allocation3 + $0xa8] sm:$0xf8] 0.0
        %1099 = vst [vmem:[#allocation3 + $0xb0] sm:$0xf8] 0.0
        %1100 = vst [vmem:[#allocation3 + $0xb8] sm:$0xf8] 0.0
        %v1101 = vld [vmem:[%s3] sm:$0xf]
        %v1102 = vld [vmem:[%s3 + $0x4] sm:$0xf]
        %v1103 = vld [vmem:[%s3 + $0x8] sm:$0xf]
        %v1104 = vld [vmem:[%s3 + $0xc] sm:$0xf]
        %v1105 = vld [vmem:[#allocation3] sm:$0xff]
        %v1106 = vld [vmem:[#allocation3 + $0x8] sm:$0xff]
        %v1107 = vld [vmem:[#allocation3 + $0x10] sm:$0xff]
        %v1108 = vld [vmem:[#allocation3 + $0x18] sm:$0xff]
        %v1109 = vld [vmem:[#allocation3 + $0x20] sm:$0xff]
        %v1110 = vld [vmem:[#allocation3 + $0x28] sm:$0xff]
        %v1111 = vld [vmem:[#allocation3 + $0x30] sm:$0xff]
        %v1112 = vld [vmem:[#allocation3 + $0x38] sm:$0xff]
        %v1113 = vld [vmem:[#allocation3 + $0x40] sm:$0xff]
        %v1114 = vld [vmem:[#allocation3 + $0x48] sm:$0xff]
        %v1115 = vld [vmem:[#allocation3 + $0x50] sm:$0xff]
        %v1116 = vld [vmem:[#allocation3 + $0x58] sm:$0xff]
        %v1117 = vld [vmem:[#allocation3 + $0x60] sm:$0xff]
        %v1118 = vld [vmem:[#allocation3 + $0x68] sm:$0xff]
        %v1119 = vld [vmem:[#allocation3 + $0x70] sm:$0xff]
        %v1120 = vld [vmem:[#allocation3 + $0x78] sm:$0xff]
        %v1121 = vld [vmem:[#allocation3 + $0x80] sm:$0xff]
        %v1122 = vld [vmem:[#allocation3 + $0x88] sm:$0xff]
        %v1123 = vld [vmem:[#allocation3 + $0x90] sm:$0xff]
        %v1124 = vld [vmem:[#allocation3 + $0x98] sm:$0xff]
        %v1125 = vld [vmem:[#allocation3 + $0xa0] sm:$0xff]
        %v1126 = vld [vmem:[#allocation3 + $0xa8] sm:$0xff]
        %v1127 = vld [vmem:[#allocation3 + $0xb0] sm:$0xff]
        %v1128 = vld [vmem:[#allocation3 + $0xb8] sm:$0xff]
        %v1129 = vpack.c.bf16 %v1111, %v1105
        %v1130 = vpack.c.bf16 %v1112, %v1106
        %v1131 = vpack.c.bf16 %v1113, %v1107
        %v1132 = vpack.c.bf16 %v1114, %v1108
        %v1133 = vpack.c.bf16 %v1115, %v1109
        %v1134 = vpack.c.bf16 %v1116, %v1110
        %v1135 = vpack.c.bf16 %v1123, %v1117
        %v1136 = vpack.c.bf16 %v1124, %v1118
        %v1137 = vpack.c.bf16 %v1125, %v1119
        %v1138 = vpack.c.bf16 %v1126, %v1120
        %v1139 = vpack.c.bf16 %v1127, %v1121
        %v1140 = vpack.c.bf16 %v1128, %v1122
        %v1141 = vld [vmem:[%s4] sm:$0xff]
        %v1142 = vld [vmem:[%s4 + $0x8] sm:$0xff]
        %v1143 = vld [vmem:[%s4 + $0x10] sm:$0xff]
        %v1144 = vld [vmem:[%s4 + $0x18] sm:$0xff]
        %1146 = vset.pattern.permute.xlu0 0
        %1147 = vperm.xlu0 %1146, %v1141
        %v1148 = vpop.permute.xlu0 %1147
        %1151 = vset.pattern.permute.xlu0 0
        %1152 = vperm.xlu0 %1151, %v1142
        %v1153 = vpop.permute.xlu0 %1152
        %1156 = vset.pattern.permute.xlu0 0
        %1157 = vperm.xlu0 %1156, %v1143
        %v1158 = vpop.permute.xlu0 %1157
        %1161 = vset.pattern.permute.xlu0 0
        %1162 = vperm.xlu0 %1161, %v1144
        %v1163 = vpop.permute.xlu0 %1162
        %v1169 = vunpack.c.l.b16 %v1101
        %v1170 = vunpack.c.l.b16 %v1102
        %v1171 = vunpack.c.l.b16 %v1103
        %v1172 = vunpack.c.l.b16 %v1104
        %v1173 = vpack.c.b16 %v1170, %v1169
        %v1174 = vpack.c.b16 %v1172, %v1171
        %vm1175 = vcmask 261120
        %v1177 = vsel %vm1175, %v1173, 0
        %v1180 = vsel %vm1175, %v1174, 0
        %1182 = vmatprep.subr.bf16.mxu0 0
        %1183 = vmatpush1.bf16.msra.mxu0 0
        %1184 = vmatprep.subr.bf16.mxu0 0
        %1185 = vmatpush1.bf16.msra.mxu0 0
        %1186 = vmatprep.subr.bf16.mxu0 0
        %1187 = vmatpush1.bf16.msra.mxu0 0
        %1188 = vmatprep.subr.bf16.mxu0 0
        %1189 = vmatpush1.bf16.msra.mxu0 0
        %1190 = vmatprep.subr.bf16.mxu0 0
        %1191 = vmatpush1.bf16.msra.mxu0 0
        %1192 = vmatprep.subr.bf16.mxu0 0
        %1193 = vmatpush1.bf16.msra.mxu0 0
        %1194 = vmatprep.subr.bf16.mxu0 %v1136
        %1195 = vmatpush1.bf16.msra.mxu0 %v1135
        %1196 = vmatprep.subr.bf16.mxu0 %v1130
        %1197 = vmatpush1.bf16.msra.mxu0 %v1129
        %1198 = vmatprep.subr.bf16.mxu0 0
        %1199 = vmatpush2.bf16.msra.mxu0 0
        %1200 = vmatprep.subr.bf16.mxu0 0
        %1201 = vmatpush2.bf16.msra.mxu0 0
        %1202 = vmatprep.subr.bf16.mxu0 0
        %1203 = vmatpush2.bf16.msra.mxu0 0
        %1204 = vmatprep.subr.bf16.mxu0 0
        %1205 = vmatpush2.bf16.msra.mxu0 0
        %1206 = vmatprep.subr.bf16.mxu0 0
        %1207 = vmatpush2.bf16.msra.mxu0 0
        %1208 = vmatprep.subr.bf16.mxu0 0
        %1209 = vmatpush2.bf16.msra.mxu0 0
        %1210 = vmatprep.subr.bf16.mxu0 0
        %1211 = vmatpush2.bf16.msra.mxu0 0
        %1212 = vmatprep.subr.bf16.mxu0 0
        %1213 = vmatpush2.bf16.msra.mxu0 0
        %1214 = vmatprep.mubr.bf16.mxu0 0
        %1215 = vmatmul.mubr.bf16.gmra.mxu0 %v1177
        %v1216 = vpop.f32.mrf.mxu0
        %v1217 = vadd.f32 %v1148, %v1216
        %v1218 = vpop.f32.mrf.mxu0
        %v1219 = vadd.f32 %v1148, %v1218
        %v1220 = vpop.f32.mrf.mxu0
        %v1221 = vadd.f32 %v1153, %v1220
        %v1222 = vpop.f32.mrf.mxu0
        %v1223 = vadd.f32 %v1153, %v1222
        %1224 = vmatprep.mubr.bf16.mxu0 0
        %1225 = vmatmul.mubr.bf16.gmra.mxu0 %v1180
        %v1226 = vpop.f32.mrf.mxu0
        %v1227 = vadd.f32 %v1158, %v1226
        %v1228 = vpop.f32.mrf.mxu0
        %v1229 = vadd.f32 %v1158, %v1228
        %v1230 = vpop.f32.mrf.mxu0
        %v1231 = vadd.f32 %v1163, %v1230
        %v1232 = vpop.f32.mrf.mxu0
        %v1233 = vadd.f32 %v1163, %v1232
        %1234 = vdwg.mxu0
        %1235 = vmatprep.subr.bf16.mxu0 0
        %1236 = vmatpush1.bf16.msra.mxu0 0
        %1237 = vmatprep.subr.bf16.mxu0 0
        %1238 = vmatpush1.bf16.msra.mxu0 0
        %1239 = vmatprep.subr.bf16.mxu0 0
        %1240 = vmatpush1.bf16.msra.mxu0 0
        %1241 = vmatprep.subr.bf16.mxu0 0
        %1242 = vmatpush1.bf16.msra.mxu0 0
        %1243 = vmatprep.subr.bf16.mxu0 0
        %1244 = vmatpush1.bf16.msra.mxu0 0
        %1245 = vmatprep.subr.bf16.mxu0 0
        %1246 = vmatpush1.bf16.msra.mxu0 0
        %1247 = vmatprep.subr.bf16.mxu0 %v1138
        %1248 = vmatpush1.bf16.msra.mxu0 %v1137
        %1249 = vmatprep.subr.bf16.mxu0 %v1132
        %1250 = vmatpush1.bf16.msra.mxu0 %v1131
        %1251 = vmatprep.subr.bf16.mxu0 0
        %1252 = vmatpush2.bf16.msra.mxu0 0
        %1253 = vmatprep.subr.bf16.mxu0 0
        %1254 = vmatpush2.bf16.msra.mxu0 0
        %1255 = vmatprep.subr.bf16.mxu0 0
        %1256 = vmatpush2.bf16.msra.mxu0 0
        %1257 = vmatprep.subr.bf16.mxu0 0
        %1258 = vmatpush2.bf16.msra.mxu0 0
        %1259 = vmatprep.subr.bf16.mxu0 0
        %1260 = vmatpush2.bf16.msra.mxu0 0
        %1261 = vmatprep.subr.bf16.mxu0 0
        %1262 = vmatpush2.bf16.msra.mxu0 0
        %1263 = vmatprep.subr.bf16.mxu0 0
        %1264 = vmatpush2.bf16.msra.mxu0 0
        %1265 = vmatprep.subr.bf16.mxu0 0
        %1266 = vmatpush2.bf16.msra.mxu0 0
        %1267 = vmatprep.mubr.bf16.mxu0 0
        %1268 = vmatmul.mubr.bf16.gmra.mxu0 %v1177
        %v1269 = vpop.f32.mrf.mxu0
        %v1270 = vadd.f32 %v1148, %v1269
        %v1271 = vpop.f32.mrf.mxu0
        %v1272 = vadd.f32 %v1148, %v1271
        %v1273 = vpop.f32.mrf.mxu0
        %v1274 = vadd.f32 %v1153, %v1273
        %v1275 = vpop.f32.mrf.mxu0
        %v1276 = vadd.f32 %v1153, %v1275
        %1277 = vmatprep.mubr.bf16.mxu0 0
        %1278 = vmatmul.mubr.bf16.gmra.mxu0 %v1180
        %v1279 = vpop.f32.mrf.mxu0
        %v1280 = vadd.f32 %v1158, %v1279
        %v1281 = vpop.f32.mrf.mxu0
        %v1282 = vadd.f32 %v1158, %v1281
        %v1283 = vpop.f32.mrf.mxu0
        %v1284 = vadd.f32 %v1163, %v1283
        %v1285 = vpop.f32.mrf.mxu0
        %v1286 = vadd.f32 %v1163, %v1285
        %1287 = vdwg.mxu0
        %1288 = vmatprep.subr.bf16.mxu0 0
        %1289 = vmatpush1.bf16.msra.mxu0 0
        %1290 = vmatprep.subr.bf16.mxu0 0
        %1291 = vmatpush1.bf16.msra.mxu0 0
        %1292 = vmatprep.subr.bf16.mxu0 0
        %1293 = vmatpush1.bf16.msra.mxu0 0
        %1294 = vmatprep.subr.bf16.mxu0 0
        %1295 = vmatpush1.bf16.msra.mxu0 0
        %1296 = vmatprep.subr.bf16.mxu0 0
        %1297 = vmatpush1.bf16.msra.mxu0 0
        %1298 = vmatprep.subr.bf16.mxu0 0
        %1299 = vmatpush1.bf16.msra.mxu0 0
        %1300 = vmatprep.subr.bf16.mxu0 %v1140
        %1301 = vmatpush1.bf16.msra.mxu0 %v1139
        %1302 = vmatprep.subr.bf16.mxu0 %v1134
        %1303 = vmatpush1.bf16.msra.mxu0 %v1133
        %1304 = vmatprep.subr.bf16.mxu0 0
        %1305 = vmatpush2.bf16.msra.mxu0 0
        %1306 = vmatprep.subr.bf16.mxu0 0
        %1307 = vmatpush2.bf16.msra.mxu0 0
        %1308 = vmatprep.subr.bf16.mxu0 0
        %1309 = vmatpush2.bf16.msra.mxu0 0
        %1310 = vmatprep.subr.bf16.mxu0 0
        %1311 = vmatpush2.bf16.msra.mxu0 0
        %1312 = vmatprep.subr.bf16.mxu0 0
        %1313 = vmatpush2.bf16.msra.mxu0 0
        %1314 = vmatprep.subr.bf16.mxu0 0
        %1315 = vmatpush2.bf16.msra.mxu0 0
        %1316 = vmatprep.subr.bf16.mxu0 0
        %1317 = vmatpush2.bf16.msra.mxu0 0
        %1318 = vmatprep.subr.bf16.mxu0 0
        %1319 = vmatpush2.bf16.msra.mxu0 0
        %1320 = vmatprep.mubr.bf16.mxu0 0
        %1321 = vmatmul.mubr.bf16.gmra.mxu0 %v1177
        %v1322 = vpop.f32.mrf.mxu0
        %v1323 = vadd.f32 %v1148, %v1322
        %v1324 = vpop.f32.mrf.mxu0
        %v1325 = vadd.f32 %v1148, %v1324
        %v1326 = vpop.f32.mrf.mxu0
        %v1327 = vadd.f32 %v1153, %v1326
        %v1328 = vpop.f32.mrf.mxu0
        %v1329 = vadd.f32 %v1153, %v1328
        %1330 = vmatprep.mubr.bf16.mxu0 0
        %1331 = vmatmul.mubr.bf16.gmra.mxu0 %v1180
        %v1332 = vpop.f32.mrf.mxu0
        %v1333 = vadd.f32 %v1158, %v1332
        %v1334 = vpop.f32.mrf.mxu0
        %v1335 = vadd.f32 %v1158, %v1334
        %v1336 = vpop.f32.mrf.mxu0
        %v1337 = vadd.f32 %v1163, %v1336
        %v1338 = vpop.f32.mrf.mxu0
        %v1339 = vadd.f32 %v1163, %v1338
        %1340 = vdwg.mxu0
        %v1341 = vmax.f32 %v1217, 0.0
        %v1342 = vmax.f32 %v1219, 0.0
        %v1343 = vmax.f32 %v1270, 0.0
        %v1344 = vmax.f32 %v1272, 0.0
        %v1345 = vmax.f32 %v1323, 0.0
        %v1346 = vmax.f32 %v1325, 0.0
        %v1347 = vmax.f32 %v1221, 0.0
        %v1348 = vmax.f32 %v1223, 0.0
        %v1349 = vmax.f32 %v1274, 0.0
        %v1350 = vmax.f32 %v1276, 0.0
        %v1351 = vmax.f32 %v1327, 0.0
        %v1352 = vmax.f32 %v1329, 0.0
        %v1353 = vmax.f32 %v1227, 0.0
        %v1354 = vmax.f32 %v1229, 0.0
        %v1355 = vmax.f32 %v1280, 0.0
        %v1356 = vmax.f32 %v1282, 0.0
        %v1357 = vmax.f32 %v1333, 0.0
        %v1358 = vmax.f32 %v1335, 0.0
        %v1359 = vmax.f32 %v1231, 0.0
        %v1360 = vmax.f32 %v1233, 0.0
        %v1361 = vmax.f32 %v1284, 0.0
        %v1362 = vmax.f32 %v1286, 0.0
        %v1363 = vmax.f32 %v1337, 0.0
        %v1364 = vmax.f32 %v1339, 0.0
        %v1365 = vadd.f32 %v1341, %v1342
        %1366 = vadd.xlane.f32.xlu0 %v1365
        %v1367 = vpop.xlane.xlu0 %1366
        %v1368 = vadd.f32 %v1347, %v1348
        %1369 = vadd.xlane.f32.xlu0 %v1368
        %v1370 = vpop.xlane.xlu0 %1369
        %v1371 = vadd.f32 %v1353, %v1354
        %1372 = vadd.xlane.f32.xlu0 %v1371
        %v1373 = vpop.xlane.xlu0 %1372
        %v1374 = vadd.f32 %v1359, %v1360
        %1375 = vadd.xlane.f32.xlu0 %v1374
        %v1376 = vpop.xlane.xlu0 %1375
        %v1377 = vrcp.pop 256.0
        %v1378 = vmul.f32 %v1367, %v1377
        %v1379 = vmul.f32 %v1370, %v1377
        %v1380 = vmul.f32 %v1373, %v1377
        %v1381 = vmul.f32 %v1376, %v1377
        %v1382 = vmul.f32 %v1341, %v1341
        %v1383 = vmul.f32 %v1342, %v1342
        %v1384 = vmul.f32 %v1347, %v1347
        %v1385 = vmul.f32 %v1348, %v1348
        %v1386 = vmul.f32 %v1353, %v1353
        %v1387 = vmul.f32 %v1354, %v1354
        %v1388 = vmul.f32 %v1359, %v1359
        %v1389 = vmul.f32 %v1360, %v1360
        %v1390 = vadd.f32 %v1382, %v1383
        %1391 = vadd.xlane.f32.xlu0 %v1390
        %v1392 = vpop.xlane.xlu0 %1391
        %v1393 = vadd.f32 %v1384, %v1385
        %1394 = vadd.xlane.f32.xlu0 %v1393
        %v1395 = vpop.xlane.xlu0 %1394
        %v1396 = vadd.f32 %v1386, %v1387
        %1397 = vadd.xlane.f32.xlu0 %v1396
        %v1398 = vpop.xlane.xlu0 %1397
        %v1399 = vadd.f32 %v1388, %v1389
        %1400 = vadd.xlane.f32.xlu0 %v1399
        %v1401 = vpop.xlane.xlu0 %1400
        %v1402 = vmul.f32 %v1392, %v1377
        %v1403 = vmul.f32 %v1395, %v1377
        %v1404 = vmul.f32 %v1398, %v1377
        %v1405 = vmul.f32 %v1401, %v1377
        %v1406 = vmul.f32 %v1378, %v1378
        %v1407 = vmul.f32 %v1379, %v1379
        %v1408 = vmul.f32 %v1380, %v1380
        %v1409 = vmul.f32 %v1381, %v1381
        %v1410 = vsub.f32 %v1402, %v1406
        %v1411 = vsub.f32 %v1403, %v1407
        %v1412 = vsub.f32 %v1404, %v1408
        %v1413 = vsub.f32 %v1405, %v1409
        %v1414 = vsub.f32 %v1341, %v1378
        %v1415 = vsub.f32 %v1342, %v1378
        %v1416 = vsub.f32 %v1347, %v1379
        %v1417 = vsub.f32 %v1348, %v1379
        %v1418 = vsub.f32 %v1353, %v1380
        %v1419 = vsub.f32 %v1354, %v1380
        %v1420 = vsub.f32 %v1359, %v1381
        %v1421 = vsub.f32 %v1360, %v1381
        %v1422 = vadd.f32 %v1410, 1e-05
        %v1423 = vadd.f32 %v1411, 1e-05
        %v1424 = vadd.f32 %v1412, 1e-05
        %v1425 = vadd.f32 %v1413, 1e-05
        %v1426 = vrsqrt.pop %v1422
        %v1427 = vrsqrt.pop %v1423
        %v1428 = vrsqrt.pop %v1424
        %v1429 = vrsqrt.pop %v1425
        %v1430 = vmul.f32 %v1414, %v1426
        %v1431 = vmul.f32 %v1415, %v1426
        %v1432 = vmul.f32 %v1416, %v1427
        %v1433 = vmul.f32 %v1417, %v1427
        %v1434 = vmul.f32 %v1418, %v1428
        %v1435 = vmul.f32 %v1419, %v1428
        %v1436 = vmul.f32 %v1420, %v1429
        %v1437 = vmul.f32 %v1421, %v1429
        %v1438 = vadd.f32 %v1343, %v1344
        %1439 = vadd.xlane.f32.xlu0 %v1438
        %v1440 = vpop.xlane.xlu0 %1439
        %v1441 = vadd.f32 %v1349, %v1350
        %1442 = vadd.xlane.f32.xlu0 %v1441
        %v1443 = vpop.xlane.xlu0 %1442
        %v1444 = vadd.f32 %v1355, %v1356
        %1445 = vadd.xlane.f32.xlu0 %v1444
        %v1446 = vpop.xlane.xlu0 %1445
        %v1447 = vadd.f32 %v1361, %v1362
        %1448 = vadd.xlane.f32.xlu0 %v1447
        %v1449 = vpop.xlane.xlu0 %1448
        %v1450 = vmul.f32 %v1440, %v1377
        %v1451 = vmul.f32 %v1443, %v1377
        %v1452 = vmul.f32 %v1446, %v1377
        %v1453 = vmul.f32 %v1449, %v1377
        %v1454 = vmul.f32 %v1343, %v1343
        %v1455 = vmul.f32 %v1344, %v1344
        %v1456 = vmul.f32 %v1349, %v1349
        %v1457 = vmul.f32 %v1350, %v1350
        %v1458 = vmul.f32 %v1355, %v1355
        %v1459 = vmul.f32 %v1356, %v1356
        %v1460 = vmul.f32 %v1361, %v1361
        %v1461 = vmul.f32 %v1362, %v1362
        %v1462 = vadd.f32 %v1454, %v1455
        %1463 = vadd.xlane.f32.xlu0 %v1462
        %v1464 = vpop.xlane.xlu0 %1463
        %v1465 = vadd.f32 %v1456, %v1457
        %1466 = vadd.xlane.f32.xlu0 %v1465
        %v1467 = vpop.xlane.xlu0 %1466
        %v1468 = vadd.f32 %v1458, %v1459
        %1469 = vadd.xlane.f32.xlu0 %v1468
        %v1470 = vpop.xlane.xlu0 %1469
        %v1471 = vadd.f32 %v1460, %v1461
        %1472 = vadd.xlane.f32.xlu0 %v1471
        %v1473 = vpop.xlane.xlu0 %1472
        %v1474 = vmul.f32 %v1464, %v1377
        %v1475 = vmul.f32 %v1467, %v1377
        %v1476 = vmul.f32 %v1470, %v1377
        %v1477 = vmul.f32 %v1473, %v1377
        %v1478 = vmul.f32 %v1450, %v1450
        %v1479 = vmul.f32 %v1451, %v1451
        %v1480 = vmul.f32 %v1452, %v1452
        %v1481 = vmul.f32 %v1453, %v1453
        %v1482 = vsub.f32 %v1474, %v1478
        %v1483 = vsub.f32 %v1475, %v1479
        %v1484 = vsub.f32 %v1476, %v1480
        %v1485 = vsub.f32 %v1477, %v1481
        %v1486 = vsub.f32 %v1343, %v1450
        %v1487 = vsub.f32 %v1344, %v1450
        %v1488 = vsub.f32 %v1349, %v1451
        %v1489 = vsub.f32 %v1350, %v1451
        %v1490 = vsub.f32 %v1355, %v1452
        %v1491 = vsub.f32 %v1356, %v1452
        %v1492 = vsub.f32 %v1361, %v1453
        %v1493 = vsub.f32 %v1362, %v1453
        %v1494 = vadd.f32 %v1482, 1e-05
        %v1495 = vadd.f32 %v1483, 1e-05
        %v1496 = vadd.f32 %v1484, 1e-05
        %v1497 = vadd.f32 %v1485, 1e-05
        %v1498 = vrsqrt.pop %v1494
        %v1499 = vrsqrt.pop %v1495
        %v1500 = vrsqrt.pop %v1496
        %v1501 = vrsqrt.pop %v1497
        %v1502 = vmul.f32 %v1486, %v1498
        %v1503 = vmul.f32 %v1487, %v1498
        %v1504 = vmul.f32 %v1488, %v1499
        %v1505 = vmul.f32 %v1489, %v1499
        %v1506 = vmul.f32 %v1490, %v1500
        %v1507 = vmul.f32 %v1491, %v1500
        %v1508 = vmul.f32 %v1492, %v1501
        %v1509 = vmul.f32 %v1493, %v1501
        %v1510 = vsub.f32 %v1430, %v1502
        %v1511 = vsub.f32 %v1431, %v1503
        %v1512 = vsub.f32 %v1432, %v1504
        %v1513 = vsub.f32 %v1433, %v1505
        %v1514 = vsub.f32 %v1434, %v1506
        %v1515 = vsub.f32 %v1435, %v1507
        %v1516 = vsub.f32 %v1436, %v1508
        %v1517 = vsub.f32 %v1437, %v1509
        %v1518 = vmul.f32 %v1510, %v1510
        %v1519 = vmul.f32 %v1511, %v1511
        %v1520 = vmul.f32 %v1512, %v1512
        %v1521 = vmul.f32 %v1513, %v1513
        %v1522 = vmul.f32 %v1514, %v1514
        %v1523 = vmul.f32 %v1515, %v1515
        %v1524 = vmul.f32 %v1516, %v1516
        %v1525 = vmul.f32 %v1517, %v1517
        %v1526 = vadd.f32 %v1518, %v1520
        %v1527 = vadd.f32 %v1526, %v1522
        %v1528 = vadd.f32 %v1527, %v1524
        %v1529 = vrot.slane %v1528, 4
        %v1530 = vadd.f32 %v1528, %v1529
        %v1531 = vrot.slane %v1530, 2
        %v1532 = vadd.f32 %v1530, %v1531
        %v1533 = vrot.slane %v1532, 1
        %v1534 = vadd.f32 %v1532, %v1533
        %v1535 = vadd.f32 %v1519, %v1521
        %v1536 = vadd.f32 %v1535, %v1523
        %v1537 = vadd.f32 %v1536, %v1525
        %v1538 = vrot.slane %v1537, 4
        %v1539 = vadd.f32 %v1537, %v1538
        %v1540 = vrot.slane %v1539, 2
        %v1541 = vadd.f32 %v1539, %v1540
        %v1542 = vrot.slane %v1541, 1
        %v1543 = vadd.f32 %v1541, %v1542
        %v1546 = vcombine.low %v1534, %v1543
        %v1548 = vunpack.c.l.s4 1966171168
        %v1549 = vunpack.c.0.s8 %v1548
        %v1550 = vlaneseq
        %v1551 = vshrl.u32 %v1550, 7
        %v1552 = vsub.s32 %v1549, %v1551
        %v1553 = vrot.slane %v1546, %v1552
        %v1555 = vunpack.c.l.s4 1966171168
        %v1556 = vunpack.c.0.s8 %v1555
        %v1557 = vlaneseq
        %v1558 = vshrl.u32 %v1557, 7
        %v1559 = vsub.s32 %v1556, %v1558
        %v1560 = vrot.slane %v1553, %v1559
        %v1562 = vlaneseq
        %vm1563 = vcmp.ge.s32.totalorder %v1562, 0
        %vm1564 = vcmp.lt.s32.totalorder %v1562, 256
        %vm1565 = vmand %vm1563, %vm1564
        %1566 = vst.msk [vmem:[%s332] sm:$0x3] %vm1565, %v1560
        %v1567 = vadd.f32 %v1345, %v1346
        %1568 = vadd.xlane.f32.xlu0 %v1567
        %v1569 = vpop.xlane.xlu0 %1568
        %v1570 = vadd.f32 %v1351, %v1352
        %1571 = vadd.xlane.f32.xlu0 %v1570
        %v1572 = vpop.xlane.xlu0 %1571
        %v1573 = vadd.f32 %v1357, %v1358
        %1574 = vadd.xlane.f32.xlu0 %v1573
        %v1575 = vpop.xlane.xlu0 %1574
        %v1576 = vadd.f32 %v1363, %v1364
        %1577 = vadd.xlane.f32.xlu0 %v1576
        %v1578 = vpop.xlane.xlu0 %1577
        %v1579 = vmul.f32 %v1569, %v1377
        %v1580 = vmul.f32 %v1572, %v1377
        %v1581 = vmul.f32 %v1575, %v1377
        %v1582 = vmul.f32 %v1578, %v1377
        %v1583 = vmul.f32 %v1345, %v1345
        %v1584 = vmul.f32 %v1346, %v1346
        %v1585 = vmul.f32 %v1351, %v1351
        %v1586 = vmul.f32 %v1352, %v1352
        %v1587 = vmul.f32 %v1357, %v1357
        %v1588 = vmul.f32 %v1358, %v1358
        %v1589 = vmul.f32 %v1363, %v1363
        %v1590 = vmul.f32 %v1364, %v1364
        %v1591 = vadd.f32 %v1583, %v1584
        %1592 = vadd.xlane.f32.xlu0 %v1591
        %v1593 = vpop.xlane.xlu0 %1592
        %v1594 = vadd.f32 %v1585, %v1586
        %1595 = vadd.xlane.f32.xlu0 %v1594
        %v1596 = vpop.xlane.xlu0 %1595
        %v1597 = vadd.f32 %v1587, %v1588
        %1598 = vadd.xlane.f32.xlu0 %v1597
        %v1599 = vpop.xlane.xlu0 %1598
        %v1600 = vadd.f32 %v1589, %v1590
        %1601 = vadd.xlane.f32.xlu0 %v1600
        %v1602 = vpop.xlane.xlu0 %1601
        %v1603 = vmul.f32 %v1593, %v1377
        %v1604 = vmul.f32 %v1596, %v1377
        %v1605 = vmul.f32 %v1599, %v1377
        %v1606 = vmul.f32 %v1602, %v1377
        %v1607 = vmul.f32 %v1579, %v1579
        %v1608 = vmul.f32 %v1580, %v1580
        %v1609 = vmul.f32 %v1581, %v1581
        %v1610 = vmul.f32 %v1582, %v1582
        %v1611 = vsub.f32 %v1603, %v1607
        %v1612 = vsub.f32 %v1604, %v1608
        %v1613 = vsub.f32 %v1605, %v1609
        %v1614 = vsub.f32 %v1606, %v1610
        %v1615 = vsub.f32 %v1345, %v1579
        %v1616 = vsub.f32 %v1346, %v1579
        %v1617 = vsub.f32 %v1351, %v1580
        %v1618 = vsub.f32 %v1352, %v1580
        %v1619 = vsub.f32 %v1357, %v1581
        %v1620 = vsub.f32 %v1358, %v1581
        %v1621 = vsub.f32 %v1363, %v1582
        %v1622 = vsub.f32 %v1364, %v1582
        %v1623 = vadd.f32 %v1611, 1e-05
        %v1624 = vadd.f32 %v1612, 1e-05
        %v1625 = vadd.f32 %v1613, 1e-05
        %v1626 = vadd.f32 %v1614, 1e-05
        %v1627 = vrsqrt.pop %v1623
        %v1628 = vrsqrt.pop %v1624
        %v1629 = vrsqrt.pop %v1625
        %v1630 = vrsqrt.pop %v1626
        %v1631 = vmul.f32 %v1615, %v1627
        %v1632 = vmul.f32 %v1616, %v1627
        %v1633 = vmul.f32 %v1617, %v1628
        %v1634 = vmul.f32 %v1618, %v1628
        %v1635 = vmul.f32 %v1619, %v1629
        %v1636 = vmul.f32 %v1620, %v1629
        %v1637 = vmul.f32 %v1621, %v1630
        %v1638 = vmul.f32 %v1622, %v1630
        %v1639 = vsub.f32 %v1430, %v1631
        %v1640 = vsub.f32 %v1431, %v1632
        %v1641 = vsub.f32 %v1432, %v1633
        %v1642 = vsub.f32 %v1433, %v1634
        %v1643 = vsub.f32 %v1434, %v1635
        %v1644 = vsub.f32 %v1435, %v1636
        %v1645 = vsub.f32 %v1436, %v1637
        %v1646 = vsub.f32 %v1437, %v1638
        %v1647 = vmul.f32 %v1639, %v1639
        %v1648 = vmul.f32 %v1640, %v1640
        %v1649 = vmul.f32 %v1641, %v1641
        %v1650 = vmul.f32 %v1642, %v1642
        %v1651 = vmul.f32 %v1643, %v1643
        %v1652 = vmul.f32 %v1644, %v1644
        %v1653 = vmul.f32 %v1645, %v1645
        %v1654 = vmul.f32 %v1646, %v1646
        %v1655 = vadd.f32 %v1647, %v1649
        %v1656 = vadd.f32 %v1655, %v1651
        %v1657 = vadd.f32 %v1656, %v1653
        %v1658 = vrot.slane %v1657, 4
        %v1659 = vadd.f32 %v1657, %v1658
        %v1660 = vrot.slane %v1659, 2
        %v1661 = vadd.f32 %v1659, %v1660
        %v1662 = vrot.slane %v1661, 1
        %v1663 = vadd.f32 %v1661, %v1662
        %v1664 = vadd.f32 %v1648, %v1650
        %v1665 = vadd.f32 %v1664, %v1652
        %v1666 = vadd.f32 %v1665, %v1654
        %v1667 = vrot.slane %v1666, 4
        %v1668 = vadd.f32 %v1666, %v1667
        %v1669 = vrot.slane %v1668, 2
        %v1670 = vadd.f32 %v1668, %v1669
        %v1671 = vrot.slane %v1670, 1
        %v1672 = vadd.f32 %v1670, %v1671
        %v1675 = vcombine.low %v1663, %v1672
        %v1677 = vunpack.c.l.s4 1966171168
        %v1678 = vunpack.c.0.s8 %v1677
        %v1679 = vlaneseq
        %v1680 = vshrl.u32 %v1679, 7
        %v1681 = vsub.s32 %v1678, %v1680
        %v1682 = vrot.slane %v1675, %v1681
        %v1684 = vunpack.c.l.s4 1966171168
        %v1685 = vunpack.c.0.s8 %v1684
        %v1686 = vlaneseq
        %v1687 = vshrl.u32 %v1686, 7
        %v1688 = vsub.s32 %v1685, %v1687
        %v1689 = vrot.slane %v1682, %v1688
        %1691 = vst.msk [vmem:[%s339] sm:$0x3] %vm1565, %v1689
        %s1692 = sand.u32 %s196, 1
        %s1693 = scalar_lea.sflag [#allocation5], %s1692
        %s1694 = sand.u32 %s196, 1
        %s1695 = smul.addr %s1694, 2
        %s1696 = scalar_lea.vmem [#allocation4], %s1695
        %s1697 = sand.u32 %s222, 1
        %s1698 = scalar_lea.sflag [#allocation7], %s1697
        %s1699 = sand.u32 %s222, 1
        %s1700 = smul.addr %s1699, 2
        %s1701 = scalar_lea.vmem [#allocation6], %s1700
        // Predicated region
        $region49: #{tpu_custom_call.1} parent=47 // pred_check
          %p1702 = pneg %p206
        $region50: #{tpu_custom_call.1} parent=47 // pred_check_branch
          %1704 = sbr.rel (%p1702) target = $region52
        $region51: #{tpu_custom_call.1} parent=47 // pred_region
          %s1706 = ssub.s32 32, 32
          %1707 = vsyncadd %s1693, %s1706
          %s1708 = smul.addr %s26, 2
          %s1709 = smul.addr %s1708, 16
          %s1710 = scalar_lea.hbm %s7, %s1709
          %s1712 = sshll.u32 %s1696, 4
          %s1713 = int_to_ptr.vmem [resolvable:$true] %s1712
          %1715 = dma.vmem_to_hbm [thread:$0]  %s1713, 32, %s1710, %s1693
        $region52: #{tpu_custom_call.1} parent=47 // pred_fallthru
          _
        // Predicated region
        $region53: #{tpu_custom_call.1} parent=47 // pred_check
          %p1716 = pneg %p232
        $region54: #{tpu_custom_call.1} parent=47 // pred_check_branch
          %1718 = sbr.rel (%p1716) target = $region56
        $region55: #{tpu_custom_call.1} parent=47 // pred_region
          %s1720 = ssub.s32 32, 32
          %1721 = vsyncadd %s1698, %s1720
          %s1722 = smul.addr %s26, 2
          %s1723 = smul.addr %s1722, 16
          %s1724 = scalar_lea.hbm %s8, %s1723
          %s1726 = sshll.u32 %s1701, 4
          %s1727 = int_to_ptr.vmem [resolvable:$true] %s1726
          %1729 = dma.vmem_to_hbm [thread:$0]  %s1727, 32, %s1724, %s1698
        $region56: #{tpu_custom_call.1} parent=47 // pred_fallthru
          _
      $region48: #{tpu_custom_call.1} parent=5 // pred_fallthru
        _
      %p1730 = scmp.le.s32.totalorder 2, %s21
      // Predicated region
      $region57: #{tpu_custom_call.1} parent=5 // pred_check
        %p1731 = pneg %p1730
      $region58: #{tpu_custom_call.1} parent=5 // pred_check_branch
        %1733 = sbr.rel (%p1731) target = $region60
      $region59: #{tpu_custom_call.1} parent=5 // pred_region
        %s1734 = ssub.s32 %s21, 2
        // Predicated region
        $region61: #{tpu_custom_call.1} parent=59 // pred_check
          %p1735 = pneg %p212
        $region62: #{tpu_custom_call.1} parent=59 // pred_check_branch
          %1737 = sbr.rel (%p1735) target = $region64
        $region63: #{tpu_custom_call.1} parent=59 // pred_region
          %s1738 = sand.u32 %s197, 1
          %s1739 = scalar_lea.sflag [#allocation5], %s1738
          %s1740 = sand.u32 %s197, 1
          %s1741 = smul.addr %s1740, 2
          %s1742 = scalar_lea.vmem [#allocation4], %s1741
          %1743 = dma.done %s1739, 32
        $region64: #{tpu_custom_call.1} parent=59 // pred_fallthru
          _
        // Predicated region
        $region65: #{tpu_custom_call.1} parent=59 // pred_check
          %p1744 = pneg %p238
        $region66: #{tpu_custom_call.1} parent=59 // pred_check_branch
          %1746 = sbr.rel (%p1744) target = $region68
        $region67: #{tpu_custom_call.1} parent=59 // pred_region
          %s1747 = sand.u32 %s223, 1
          %s1748 = scalar_lea.sflag [#allocation7], %s1747
          %s1749 = sand.u32 %s223, 1
          %s1750 = smul.addr %s1749, 2
          %s1751 = scalar_lea.vmem [#allocation6], %s1750
          %1752 = dma.done %s1748, 32
        $region68: #{tpu_custom_call.1} parent=59 // pred_fallthru
          _
      $region60: #{tpu_custom_call.1} parent=5 // pred_fallthru
        _
    $region6: #{tpu_custom_call.1} parent=1 // loop_footer
      %s25 = sadd.s32 1, %s21
    $region7: #{tpu_custom_call.1} parent=1 // loop_footer_branch
      %20 = sbr.rel target = $region3
    $region8: #{tpu_custom_call.1} parent=1 // loop_exit
      _
    %1753 = vsyncpa [#allocation5], 1
    %s1754 = scalar_lea.sflag [#allocation5], 1
    %1755 = vsyncpa %s1754, 1
    %1756 = vsyncpa [#allocation7], 1
    %s1757 = scalar_lea.sflag [#allocation7], 1
    %1758 = vsyncpa %s1757, 1

</llo_original>
